<compile_context>
chip_gen: v5e
topology: v5e:2x2
jax: 0.10.0
libtpu: 0.0.40
codegen_flags: <defaults>
</compile_context>

<pallas_src>
import functools
import math

import jax
import jax.numpy as jnp
import numpy as np
from jax.experimental import pallas as pl
from jax.experimental.pallas import tpu as pltpu

LN_EPS = 1e-5


# ----------------------------- kernel -----------------------------------------


def _layernorm(x, gamma, beta):
    # x: (M, D) f32; gamma/beta: (1, D) f32
    mean = jnp.mean(x, axis=-1, keepdims=True)
    var = jnp.mean((x - mean) ** 2, axis=-1, keepdims=True)
    return (x - mean) * jax.lax.rsqrt(var + LN_EPS) * gamma + beta


def layer_kernel(x_ref,
                 g1_ref, bt1_ref, wqkv_ref, wout_ref, bout_ref,
                 g2_ref, bt2_ref, w1_ref, b1_ref, w2_ref, b2_ref,
                 o_ref,
                 *, heads, dim_head):
    # grid = (batch_tiles, depth); the output block for this batch tile stays resident
    # in VMEM across all depth steps and acts as the running activation.
    l = pl.program_id(1)

    @pl.when(l == 0)
    def _():
        o_ref[...] = x_ref[...]          # load input activation into resident buffer

    TB, N, D = o_ref.shape
    M = TB * N
    H, dh = heads, dim_head
    scale = dh ** (-0.5)

    x = o_ref[...].reshape(M, D)          # (M, D) f32, current activation (rows = (b, n))

    # ----------------- Attention (pre-LN, residual) -----------------
    xn = _layernorm(x, g1_ref[0], bt1_ref[0])                                 # f32
    qkv = jnp.dot(xn.astype(jnp.bfloat16), wqkv_ref[0],
                  preferred_element_type=jnp.float32)                         # (M, 3*H*dh)

    # (M, 3*H*dh) -> (3H, M, dh); then split q/k/v and fold TB into the MXU batch dim.
    qkv_h = jnp.transpose(
        qkv.reshape(M, 3 * H, dh).astype(jnp.bfloat16), (1, 0, 2))            # (3H, M, dh)
    q = qkv_h[:H].reshape(H * TB, N, dh)
    k = qkv_h[H:2 * H].reshape(H * TB, N, dh)
    v = qkv_h[2 * H:].reshape(H * TB, N, dh)

    s = jnp.einsum("xnd,xmd->xnm", q, k,
                   preferred_element_type=jnp.float32) * scale                # (H*TB, N, N) f32
    s = s - jnp.max(s, axis=-1, keepdims=True)
    p = jnp.exp(s)
    p = p * pl.reciprocal(jnp.sum(p, axis=-1, keepdims=True), approx=True)

    o = jnp.einsum("xnm,xmd->xnd", p.astype(jnp.bfloat16), v,
                   preferred_element_type=jnp.float32)                        # (H*TB, N, dh)

    # Output projection without the (b h n d)->(b n (h d)) transpose:
    #   concat_h(o_h) @ Wout == sum_h o_h @ Wout[h]
    o = o.reshape(H, M, dh).astype(jnp.bfloat16)                              # rows = (b, n)
    per_head = jnp.einsum("hmd,hdk->hmk", o, wout_ref[0],
                          preferred_element_type=jnp.float32)                 # (H, M, D)
    attn_out = jnp.sum(per_head, axis=0) + bout_ref[0]
    x = x + attn_out                                                          # residual (f32)

    # ----------------- FeedForward (pre-LN, residual) -----------------
    xn2 = _layernorm(x, g2_ref[0], bt2_ref[0])
    h1 = jnp.dot(xn2.astype(jnp.bfloat16), w1_ref[0],
                 preferred_element_type=jnp.float32) + b1_ref[0]
    # exact (erf-based) GELU, matching torch.nn.GELU default
    h1 = 0.5 * h1 * (1.0 + jax.lax.erf(h1 * (1.0 / math.sqrt(2.0))))
    y = jnp.dot(h1.astype(jnp.bfloat16), w2_ref[0],
                preferred_element_type=jnp.float32) + b2_ref[0]
    x = x + y                                                                 # residual (f32)

    o_ref[...] = x.reshape(TB, N, D).astype(o_ref.dtype)


# ----------------------------- wrapper -----------------------------------------


def transformer_forward(x, params, *, heads, dim_head, depth, mlp_dim, batch_tile=None):
    B, N, D = x.shape
    inner = heads * dim_head
    TB = B if batch_tile is None else batch_tile
    assert B % TB == 0, "batch must be divisible by the batch tile"
    (g1, bt1, wqkv, wout, bout, g2, bt2, w1, b1, w2, b2) = params

    # Pre-split the output projection per head (layout plumbing done in the wrapper).
    wout_r = wout.reshape(depth, heads, dim_head, D)

    def w_spec(shape):
        # per-layer weight block, selected by the depth grid index (auto-prefetched)
        zeros = (0,) * len(shape)
        return pl.BlockSpec((1,) + shape, lambda b, l: (l,) + zeros)

    return pl.pallas_call(
        functools.partial(layer_kernel, heads=heads, dim_head=dim_head),
        out_shape=jax.ShapeDtypeStruct((B, N, D), jnp.float32),
        grid=(B // TB, depth),
        in_specs=[
            pl.BlockSpec((TB, N, D), lambda b, l: (b, 0, 0)),  # x (read once per tile)
            w_spec((1, D)),                  # LN1 gamma
            w_spec((1, D)),                  # LN1 beta
            w_spec((D, 3 * inner)),          # W_qkv (bf16)
            w_spec((heads, dim_head, D)),    # W_out per head (bf16)
            w_spec((1, D)),                  # b_out
            w_spec((1, D)),                  # LN2 gamma
            w_spec((1, D)),                  # LN2 beta
            w_spec((D, mlp_dim)),            # W1 (bf16)
            w_spec((1, mlp_dim)),            # b1
            w_spec((mlp_dim, D)),            # W2 (bf16)
            w_spec((1, D)),                  # b2
        ],
        out_specs=pl.BlockSpec((TB, N, D), lambda b, l: (b, 0, 0)),  # resident across depth
        compiler_params=pltpu.CompilerParams(
            dimension_semantics=("parallel", "arbitrary")),
    )(x, g1, bt1, wqkv, wout_r, bout, g2, bt2, w1, b1, w2, b2)


# ----------------------------- params & reference -------------------------------


def init_params(key, dim, depth, heads, dim_head, mlp_dim):
    inner = heads * dim_head
    keys = jax.random.split(key, 8)
    bf16 = jnp.bfloat16
    # per-layer weights stacked along a leading depth axis; matmul weights in bf16
    g1 = 1.0 + 0.1 * jax.random.normal(keys[0], (depth, 1, dim), jnp.float32)
    bt1 = 0.1 * jax.random.normal(keys[1], (depth, 1, dim), jnp.float32)
    wqkv = (0.02 * jax.random.normal(keys[2], (depth, dim, 3 * inner), jnp.float32)).astype(bf16)
    wout = (0.02 * jax.random.normal(keys[3], (depth, inner, dim), jnp.float32)).astype(bf16)
    bout = jnp.zeros((depth, 1, dim), jnp.float32)
    g2 = 1.0 + 0.1 * jax.random.normal(keys[4], (depth, 1, dim), jnp.float32)
    bt2 = 0.1 * jax.random.normal(keys[5], (depth, 1, dim), jnp.float32)
    w1 = (0.02 * jax.random.normal(keys[6], (depth, dim, mlp_dim), jnp.float32)).astype(bf16)
    b1 = jnp.zeros((depth, 1, mlp_dim), jnp.float32)
    w2 = (0.02 * jax.random.normal(keys[7], (depth, mlp_dim, dim), jnp.float32)).astype(bf16)
    b2 = jnp.zeros((depth, 1, dim), jnp.float32)
    return (g1, bt1, wqkv, wout, bout, g2, bt2, w1, b1, w2, b2)


def reference_forward(x, params, *, heads, dim_head, depth):
    # pure-jnp f32 reference mirroring the PyTorch module (same bf16-stored weights,
    # upcast exactly to f32)
    g1, bt1, wqkv, wout, bout, g2, bt2, w1, b1, w2, b2 = params

    def ln(x, g, b):
        m = jnp.mean(x, axis=-1, keepdims=True)
        v = jnp.mean((x - m) ** 2, axis=-1, keepdims=True)
        return (x - m) / jnp.sqrt(v + LN_EPS) * g + b

    B, N, D = x.shape
    inner = heads * dim_head
    for l in range(depth):
        xn = ln(x, g1[l], bt1[l])
        qkv = xn @ wqkv[l].astype(jnp.float32)
        q, k, v = jnp.split(qkv, 3, axis=-1)
        q = q.reshape(B, N, heads, dim_head).transpose(0, 2, 1, 3)
        k = k.reshape(B, N, heads, dim_head).transpose(0, 2, 1, 3)
        v = v.reshape(B, N, heads, dim_head).transpose(0, 2, 1, 3)
        s = jnp.einsum("bhnd,bhmd->bhnm", q, k) * (dim_head ** -0.5)
        p = jax.nn.softmax(s, axis=-1)
        o = jnp.einsum("bhnm,bhmd->bhnd", p, v)
        o = o.transpose(0, 2, 1, 3).reshape(B, N, inner)
        x = o @ wout[l].astype(jnp.float32) + bout[l] + x
        xn = ln(x, g2[l], bt2[l])
        h = xn @ w1[l].astype(jnp.float32) + b1[l]
        h = 0.5 * h * (1.0 + jax.lax.erf(h / jnp.sqrt(2.0)))
        x = h @ w2[l].astype(jnp.float32) + b2[l] + x
    return x


# ----------------------------- main --------------------------------------------

if __name__ == "__main__":
    # small shapes consistent with the module
    B, N = 2, 8
    dim, depth, heads, dim_head, mlp_dim = 32, 2, 4, 16, 64

    key = jax.random.PRNGKey(0)
    kx, kp = jax.random.split(key)
    x = jax.random.normal(kx, (B, N, dim), jnp.float32)
    params = init_params(kp, dim, depth, heads, dim_head, mlp_dim)

    fwd = jax.jit(functools.partial(
        transformer_forward, heads=heads, dim_head=dim_head, depth=depth, mlp_dim=mlp_dim))
    out = jax.block_until_ready(fwd(x, params))

    ref = reference_forward(x, params, heads=heads, dim_head=dim_head, depth=depth)
    # bf16 activation casts at the MXU inputs -> slightly looser tolerance vs f32 reference
    np.testing.assert_allclose(np.asarray(out), np.asarray(ref), atol=2e-2, rtol=2e-2)

    print("KERNEL_OK")
</pallas_src>

<mosaic_0001>
module attributes {stable_mosaic.version = 11 : i64} {
  func.func @layer_kernel(%arg0: i32, %arg1: i32, %arg2: memref<2x8x32xf32, #tpu.memory_space<vmem>>, %arg3: memref<1x1x32xf32, #tpu.memory_space<vmem>>, %arg4: memref<1x1x32xf32, #tpu.memory_space<vmem>>, %arg5: memref<1x32x192xbf16, #tpu.memory_space<vmem>>, %arg6: memref<1x4x16x32xbf16, #tpu.memory_space<vmem>>, %arg7: memref<1x1x32xf32, #tpu.memory_space<vmem>>, %arg8: memref<1x1x32xf32, #tpu.memory_space<vmem>>, %arg9: memref<1x1x32xf32, #tpu.memory_space<vmem>>, %arg10: memref<1x32x64xbf16, #tpu.memory_space<vmem>>, %arg11: memref<1x1x64xf32, #tpu.memory_space<vmem>>, %arg12: memref<1x64x32xbf16, #tpu.memory_space<vmem>>, %arg13: memref<1x1x32xf32, #tpu.memory_space<vmem>>, %arg14: memref<2x8x32xf32, #tpu.memory_space<vmem>>) attributes {dimension_semantics = [#tpu.dimension_semantics<parallel>, #tpu.dimension_semantics<arbitrary>], iteration_bounds = array<i64: 1, 2>, scalar_prefetch = 0 : i64, scratch_operands = 0 : i64, tpu.core_type = #tpu.core_type<tc>, window_params = [{transform_indices = @transform_0, window_bounds = array<i64: 2, 8, 32>}, {transform_indices = @transform_1, window_bounds = array<i64: 1, 1, 32>}, {transform_indices = @transform_2, window_bounds = array<i64: 1, 1, 32>}, {transform_indices = @transform_3, window_bounds = array<i64: 1, 32, 192>}, {transform_indices = @transform_4, window_bounds = array<i64: 1, 4, 16, 32>}, {transform_indices = @transform_5, window_bounds = array<i64: 1, 1, 32>}, {transform_indices = @transform_6, window_bounds = array<i64: 1, 1, 32>}, {transform_indices = @transform_7, window_bounds = array<i64: 1, 1, 32>}, {transform_indices = @transform_8, window_bounds = array<i64: 1, 32, 64>}, {transform_indices = @transform_9, window_bounds = array<i64: 1, 1, 64>}, {transform_indices = @transform_10, window_bounds = array<i64: 1, 64, 32>}, {transform_indices = @transform_11, window_bounds = array<i64: 1, 1, 32>}, {transform_indices = @transform_12, window_bounds = array<i64: 2, 8, 32>}]} {
    %c0_i32 = arith.constant 0 : i32
    %0 = arith.cmpi eq, %arg1, %c0_i32 : i32
    %1 = arith.extui %0 : i1 to i32
    %c0_i32_0 = arith.constant 0 : i32
    %2 = arith.cmpi ne, %1, %c0_i32_0 : i32
    scf.if %2 {
      %c0_62 = arith.constant 0 : index
      %c0_63 = arith.constant 0 : index
      %c0_64 = arith.constant 0 : index
      %123 = vector.load %arg2[%c0_62, %c0_63, %c0_64] : memref<2x8x32xf32, #tpu.memory_space<vmem>>, vector<2x8x32xf32>
      %c0_65 = arith.constant 0 : index
      %c0_66 = arith.constant 0 : index
      %c0_67 = arith.constant 0 : index
      %124 = vector.load %arg14[%c0_65, %c0_66, %c0_67] : memref<2x8x32xf32, #tpu.memory_space<vmem>>, vector<2x8x32xf32>
      tpu.vector_store %arg14[%c0_65, %c0_66, %c0_67], %123 {strides = array<i32>} : memref<2x8x32xf32, #tpu.memory_space<vmem>>, vector<2x8x32xf32>,
    } else {
    }
    %c0 = arith.constant 0 : index
    %c0_1 = arith.constant 0 : index
    %c0_2 = arith.constant 0 : index
    %3 = vector.load %arg14[%c0, %c0_1, %c0_2] : memref<2x8x32xf32, #tpu.memory_space<vmem>>, vector<2x8x32xf32>
    %4 = vector.shape_cast %3 : vector<2x8x32xf32> to vector<16x32xf32>
    %c0_3 = arith.constant 0 : index
    %c0_4 = arith.constant 0 : index
    %c0_5 = arith.constant 0 : index
    %5 = vector.load %arg3[%c0_3, %c0_4, %c0_5] : memref<1x1x32xf32, #tpu.memory_space<vmem>>, vector<1x1x32xf32>
    %6 = vector.shape_cast %5 : vector<1x1x32xf32> to vector<1x32xf32>
    %c0_6 = arith.constant 0 : index
    %c0_7 = arith.constant 0 : index
    %c0_8 = arith.constant 0 : index
    %7 = vector.load %arg4[%c0_6, %c0_7, %c0_8] : memref<1x1x32xf32, #tpu.memory_space<vmem>>, vector<1x1x32xf32>
    %8 = vector.shape_cast %7 : vector<1x1x32xf32> to vector<1x32xf32>
    %cst = arith.constant dense<0.000000e+00> : vector<16xf32>
    %9 = vector.multi_reduction <add>, %4, %cst [1] : vector<16x32xf32> to vector<16xf32>
    %10 = vector.shape_cast %9 : vector<16xf32> to vector<16x1xf32>
    %cst_9 = arith.constant 3.200000e+01 : f32
    %11 = vector.broadcast %cst_9 : f32 to vector<16x1xf32>
    %12 = arith.divf %10, %11 : vector<16x1xf32>
    %13 = vector.broadcast %12 : vector<16x1xf32> to vector<16x32xf32>
    %14 = arith.subf %4, %13 : vector<16x32xf32>
    %15 = arith.mulf %14, %14 : vector<16x32xf32>
    %cst_10 = arith.constant dense<0.000000e+00> : vector<16xf32>
    %16 = vector.multi_reduction <add>, %15, %cst_10 [1] : vector<16x32xf32> to vector<16xf32>
    %17 = vector.shape_cast %16 : vector<16xf32> to vector<16x1xf32>
    %cst_11 = arith.constant 3.200000e+01 : f32
    %18 = vector.broadcast %cst_11 : f32 to vector<16x1xf32>
    %19 = arith.divf %17, %18 : vector<16x1xf32>
    %20 = vector.broadcast %12 : vector<16x1xf32> to vector<16x32xf32>
    %21 = arith.subf %4, %20 : vector<16x32xf32>
    %cst_12 = arith.constant 9.99999974E-6 : f32
    %22 = vector.broadcast %cst_12 : f32 to vector<16x1xf32>
    %23 = arith.addf %19, %22 : vector<16x1xf32>
    %24 = math.rsqrt %23 : vector<16x1xf32>
    %25 = vector.broadcast %24 : vector<16x1xf32> to vector<16x32xf32>
    %26 = arith.mulf %21, %25 : vector<16x32xf32>
    %27 = vector.broadcast %6 : vector<1x32xf32> to vector<16x32xf32>
    %28 = arith.mulf %26, %27 : vector<16x32xf32>
    %29 = vector.broadcast %8 : vector<1x32xf32> to vector<16x32xf32>
    %30 = arith.addf %28, %29 : vector<16x32xf32>
    %31 = arith.truncf %30 : vector<16x32xf32> to vector<16x32xbf16>
    %c0_13 = arith.constant 0 : index
    %c0_14 = arith.constant 0 : index
    %c0_15 = arith.constant 0 : index
    %32 = vector.load %arg5[%c0_13, %c0_14, %c0_15] : memref<1x32x192xbf16, #tpu.memory_space<vmem>>, vector<1x32x192xbf16>
    %33 = vector.shape_cast %32 : vector<1x32x192xbf16> to vector<32x192xbf16>
    %cst_16 = arith.constant dense<0.000000e+00> : vector<16x192xf32>
    %34 = tpu.matmul %31, %33, %cst_16 {dimension_numbers = #tpu.dot_dimension_numbers<[1], [0], [0], [1], [0, 0, 1, 1], [], []>} : vector<16x32xbf16>, vector<32x192xbf16>, vector<16x192xf32> -> vector<16x192xf32>
    %35 = vector.shape_cast %34 : vector<16x192xf32> to vector<16x12x16xf32>
    %36 = arith.truncf %35 : vector<16x12x16xf32> to vector<16x12x16xbf16>
    %37 = tpu.transpose %36, [1, 0, 2] : vector<16x12x16xbf16> -> vector<12x16x16xbf16>
    %38 = vector.extract_strided_slice %37 {offsets = [0, 0, 0], sizes = [4, 16, 16], strides = [1, 1, 1]} : vector<12x16x16xbf16> to vector<4x16x16xbf16>
    %39 = vector.shape_cast %38 : vector<4x16x16xbf16> to vector<8x8x16xbf16>
    %40 = vector.extract_strided_slice %37 {offsets = [4, 0, 0], sizes = [4, 16, 16], strides = [1, 1, 1]} : vector<12x16x16xbf16> to vector<4x16x16xbf16>
    %41 = vector.shape_cast %40 : vector<4x16x16xbf16> to vector<8x8x16xbf16>
    %42 = vector.extract_strided_slice %37 {offsets = [8, 0, 0], sizes = [4, 16, 16], strides = [1, 1, 1]} : vector<12x16x16xbf16> to vector<4x16x16xbf16>
    %43 = vector.shape_cast %42 : vector<4x16x16xbf16> to vector<8x8x16xbf16>
    "tpu.trace_start"() <{level = 10 : i32, message = "xnd,xmd->xnm"}> : () -> ()
    %cst_17 = arith.constant dense<0.000000e+00> : vector<8x8x8xf32>
    %44 = tpu.matmul %39, %41, %cst_17 {dimension_numbers = #tpu.dot_dimension_numbers<[2], [2], [1], [1], [0, 0, 0, 1, 1, 1], [0], [0]>} : vector<8x8x16xbf16>, vector<8x8x16xbf16>, vector<8x8x8xf32> -> vector<8x8x8xf32>
    "tpu.trace_stop"() : () -> ()
    %cst_18 = arith.constant 2.500000e-01 : f32
    %45 = vector.broadcast %cst_18 : f32 to vector<8x8x8xf32>
    %46 = arith.mulf %44, %45 : vector<8x8x8xf32>
    %cst_19 = arith.constant dense<0xFF800000> : vector<8x8xf32>
    %47 = vector.multi_reduction <maximumf>, %46, %cst_19 [2] : vector<8x8x8xf32> to vector<8x8xf32>
    %48 = vector.shape_cast %47 : vector<8x8xf32> to vector<8x8x1xf32>
    %49 = vector.broadcast %48 : vector<8x8x1xf32> to vector<8x8x8xf32>
    %50 = arith.subf %46, %49 : vector<8x8x8xf32>
    %51 = math.exp %50 : vector<8x8x8xf32>
    %cst_20 = arith.constant dense<0.000000e+00> : vector<8x8xf32>
    %52 = vector.multi_reduction <add>, %51, %cst_20 [2] : vector<8x8x8xf32> to vector<8x8xf32>
    %53 = vector.shape_cast %52 : vector<8x8xf32> to vector<8x8x1xf32>
    %54 = tpu.reciprocal %53 {approx = true} : vector<8x8x1xf32> -> vector<8x8x1xf32>
    %55 = vector.broadcast %54 : vector<8x8x1xf32> to vector<8x8x8xf32>
    %56 = arith.mulf %51, %55 : vector<8x8x8xf32>
    %57 = arith.truncf %56 : vector<8x8x8xf32> to vector<8x8x8xbf16>
    "tpu.trace_start"() <{level = 10 : i32, message = "xnm,xmd->xnd"}> : () -> ()
    %cst_21 = arith.constant dense<0.000000e+00> : vector<8x8x16xf32>
    %58 = tpu.matmul %57, %43, %cst_21 {dimension_numbers = #tpu.dot_dimension_numbers<[2], [1], [1], [2], [0, 0, 0, 1, 1, 2], [0], [0]>} : vector<8x8x8xbf16>, vector<8x8x16xbf16>, vector<8x8x16xf32> -> vector<8x8x16xf32>
    "tpu.trace_stop"() : () -> ()
    %59 = vector.shape_cast %58 : vector<8x8x16xf32> to vector<4x16x16xf32>
    %60 = arith.truncf %59 : vector<4x16x16xf32> to vector<4x16x16xbf16>
    %c0_22 = arith.constant 0 : index
    %c0_23 = arith.constant 0 : index
    %c0_24 = arith.constant 0 : index
    %c0_25 = arith.constant 0 : index
    %61 = vector.load %arg6[%c0_22, %c0_23, %c0_24, %c0_25] : memref<1x4x16x32xbf16, #tpu.memory_space<vmem>>, vector<1x4x16x32xbf16>
    %62 = vector.shape_cast %61 : vector<1x4x16x32xbf16> to vector<4x16x32xbf16>
    "tpu.trace_start"() <{level = 10 : i32, message = "hmd,hdk->hmk"}> : () -> ()
    %cst_26 = arith.constant dense<0.000000e+00> : vector<4x16x32xf32>
    %63 = tpu.matmul %60, %62, %cst_26 {dimension_numbers = #tpu.dot_dimension_numbers<[2], [1], [1], [2], [0, 0, 0, 1, 1, 2], [0], [0]>} : vector<4x16x16xbf16>, vector<4x16x32xbf16>, vector<4x16x32xf32> -> vector<4x16x32xf32>
    "tpu.trace_stop"() : () -> ()
    %cst_27 = arith.constant dense<0.000000e+00> : vector<16x32xf32>
    %64 = vector.multi_reduction <add>, %63, %cst_27 [0] : vector<4x16x32xf32> to vector<16x32xf32>
    %c0_28 = arith.constant 0 : index
    %c0_29 = arith.constant 0 : index
    %c0_30 = arith.constant 0 : index
    %65 = vector.load %arg7[%c0_28, %c0_29, %c0_30] : memref<1x1x32xf32, #tpu.memory_space<vmem>>, vector<1x1x32xf32>
    %66 = vector.shape_cast %65 : vector<1x1x32xf32> to vector<1x32xf32>
    %67 = vector.broadcast %66 : vector<1x32xf32> to vector<16x32xf32>
    %68 = arith.addf %64, %67 : vector<16x32xf32>
    %69 = arith.addf %4, %68 : vector<16x32xf32>
    %c0_31 = arith.constant 0 : index
    %c0_32 = arith.constant 0 : index
    %c0_33 = arith.constant 0 : index
    %70 = vector.load %arg8[%c0_31, %c0_32, %c0_33] : memref<1x1x32xf32, #tpu.memory_space<vmem>>, vector<1x1x32xf32>
    %71 = vector.shape_cast %70 : vector<1x1x32xf32> to vector<1x32xf32>
    %c0_34 = arith.constant 0 : index
    %c0_35 = arith.constant 0 : index
    %c0_36 = arith.constant 0 : index
    %72 = vector.load %arg9[%c0_34, %c0_35, %c0_36] : memref<1x1x32xf32, #tpu.memory_space<vmem>>, vector<1x1x32xf32>
    %73 = vector.shape_cast %72 : vector<1x1x32xf32> to vector<1x32xf32>
    %cst_37 = arith.constant dense<0.000000e+00> : vector<16xf32>
    %74 = vector.multi_reduction <add>, %69, %cst_37 [1] : vector<16x32xf32> to vector<16xf32>
    %75 = vector.shape_cast %74 : vector<16xf32> to vector<16x1xf32>
    %cst_38 = arith.constant 3.200000e+01 : f32
    %76 = vector.broadcast %cst_38 : f32 to vector<16x1xf32>
    %77 = arith.divf %75, %76 : vector<16x1xf32>
    %78 = vector.broadcast %77 : vector<16x1xf32> to vector<16x32xf32>
    %79 = arith.subf %69, %78 : vector<16x32xf32>
    %80 = arith.mulf %79, %79 : vector<16x32xf32>
    %cst_39 = arith.constant dense<0.000000e+00> : vector<16xf32>
    %81 = vector.multi_reduction <add>, %80, %cst_39 [1] : vector<16x32xf32> to vector<16xf32>
    %82 = vector.shape_cast %81 : vector<16xf32> to vector<16x1xf32>
    %cst_40 = arith.constant 3.200000e+01 : f32
    %83 = vector.broadcast %cst_40 : f32 to vector<16x1xf32>
    %84 = arith.divf %82, %83 : vector<16x1xf32>
    %85 = vector.broadcast %77 : vector<16x1xf32> to vector<16x32xf32>
    %86 = arith.subf %69, %85 : vector<16x32xf32>
    %cst_41 = arith.constant 9.99999974E-6 : f32
    %87 = vector.broadcast %cst_41 : f32 to vector<16x1xf32>
    %88 = arith.addf %84, %87 : vector<16x1xf32>
    %89 = math.rsqrt %88 : vector<16x1xf32>
    %90 = vector.broadcast %89 : vector<16x1xf32> to vector<16x32xf32>
    %91 = arith.mulf %86, %90 : vector<16x32xf32>
    %92 = vector.broadcast %71 : vector<1x32xf32> to vector<16x32xf32>
    %93 = arith.mulf %91, %92 : vector<16x32xf32>
    %94 = vector.broadcast %73 : vector<1x32xf32> to vector<16x32xf32>
    %95 = arith.addf %93, %94 : vector<16x32xf32>
    %96 = arith.truncf %95 : vector<16x32xf32> to vector<16x32xbf16>
    %c0_42 = arith.constant 0 : index
    %c0_43 = arith.constant 0 : index
    %c0_44 = arith.constant 0 : index
    %97 = vector.load %arg10[%c0_42, %c0_43, %c0_44] : memref<1x32x64xbf16, #tpu.memory_space<vmem>>, vector<1x32x64xbf16>
    %98 = vector.shape_cast %97 : vector<1x32x64xbf16> to vector<32x64xbf16>
    %cst_45 = arith.constant dense<0.000000e+00> : vector<16x64xf32>
    %99 = tpu.matmul %96, %98, %cst_45 {dimension_numbers = #tpu.dot_dimension_numbers<[1], [0], [0], [1], [0, 0, 1, 1], [], []>} : vector<16x32xbf16>, vector<32x64xbf16>, vector<16x64xf32> -> vector<16x64xf32>
    %c0_46 = arith.constant 0 : index
    %c0_47 = arith.constant 0 : index
    %c0_48 = arith.constant 0 : index
    %100 = vector.load %arg11[%c0_46, %c0_47, %c0_48] : memref<1x1x64xf32, #tpu.memory_space<vmem>>, vector<1x1x64xf32>
    %101 = vector.shape_cast %100 : vector<1x1x64xf32> to vector<1x64xf32>
    %102 = vector.broadcast %101 : vector<1x64xf32> to vector<16x64xf32>
    %103 = arith.addf %99, %102 : vector<16x64xf32>
    %cst_49 = arith.constant 5.000000e-01 : f32
    %104 = vector.broadcast %cst_49 : f32 to vector<16x64xf32>
    %105 = arith.mulf %104, %103 : vector<16x64xf32>
    %cst_50 = arith.constant 0.707106769 : f32
    %106 = vector.broadcast %cst_50 : f32 to vector<16x64xf32>
    %107 = arith.mulf %103, %106 : vector<16x64xf32>
    %108 = math.erf %107 : vector<16x64xf32>
    %cst_51 = arith.constant 1.000000e+00 : f32
    %109 = vector.broadcast %cst_51 : f32 to vector<16x64xf32>
    %110 = arith.addf %109, %108 : vector<16x64xf32>
    %111 = arith.mulf %105, %110 : vector<16x64xf32>
    %112 = arith.truncf %111 : vector<16x64xf32> to vector<16x64xbf16>
    %c0_52 = arith.constant 0 : index
    %c0_53 = arith.constant 0 : index
    %c0_54 = arith.constant 0 : index
    %113 = vector.load %arg12[%c0_52, %c0_53, %c0_54] : memref<1x64x32xbf16, #tpu.memory_space<vmem>>, vector<1x64x32xbf16>
    %114 = vector.shape_cast %113 : vector<1x64x32xbf16> to vector<64x32xbf16>
    %cst_55 = arith.constant dense<0.000000e+00> : vector<16x32xf32>
    %115 = tpu.matmul %112, %114, %cst_55 {dimension_numbers = #tpu.dot_dimension_numbers<[1], [0], [0], [1], [0, 0, 1, 1], [], []>} : vector<16x64xbf16>, vector<64x32xbf16>, vector<16x32xf32> -> vector<16x32xf32>
    %c0_56 = arith.constant 0 : index
    %c0_57 = arith.constant 0 : index
    %c0_58 = arith.constant 0 : index
    %116 = vector.load %arg13[%c0_56, %c0_57, %c0_58] : memref<1x1x32xf32, #tpu.memory_space<vmem>>, vector<1x1x32xf32>
    %117 = vector.shape_cast %116 : vector<1x1x32xf32> to vector<1x32xf32>
    %118 = vector.broadcast %117 : vector<1x32xf32> to vector<16x32xf32>
    %119 = arith.addf %115, %118 : vector<16x32xf32>
    %120 = arith.addf %69, %119 : vector<16x32xf32>
    %121 = vector.shape_cast %120 : vector<16x32xf32> to vector<2x8x32xf32>
    %c0_59 = arith.constant 0 : index
    %c0_60 = arith.constant 0 : index
    %c0_61 = arith.constant 0 : index
    %122 = vector.load %arg14[%c0_59, %c0_60, %c0_61] : memref<2x8x32xf32, #tpu.memory_space<vmem>>, vector<2x8x32xf32>
    tpu.vector_store %arg14[%c0_59, %c0_60, %c0_61], %121 {strides = array<i32>} : memref<2x8x32xf32, #tpu.memory_space<vmem>>, vector<2x8x32xf32>,
    return
  }
  func.func @transform_0(%arg0: i32, %arg1: i32) -> (i32, i32, i32) {
    %c0_i32 = arith.constant 0 : i32
    %c0_i32_0 = arith.constant 0 : i32
    %c0_i32_1 = arith.constant 0 : i32
    return %arg0, %c0_i32, %c0_i32_0 : i32, i32, i32
  }
  func.func @transform_1(%arg0: i32, %arg1: i32) -> (i32, i32, i32) {
    %c0_i32 = arith.constant 0 : i32
    %c0_i32_0 = arith.constant 0 : i32
    %c0_i32_1 = arith.constant 0 : i32
    return %arg1, %c0_i32, %c0_i32_0 : i32, i32, i32
  }
  func.func @transform_2(%arg0: i32, %arg1: i32) -> (i32, i32, i32) {
    %c0_i32 = arith.constant 0 : i32
    %c0_i32_0 = arith.constant 0 : i32
    %c0_i32_1 = arith.constant 0 : i32
    return %arg1, %c0_i32, %c0_i32_0 : i32, i32, i32
  }
  func.func @transform_3(%arg0: i32, %arg1: i32) -> (i32, i32, i32) {
    %c0_i32 = arith.constant 0 : i32
    %c0_i32_0 = arith.constant 0 : i32
    %c0_i32_1 = arith.constant 0 : i32
    return %arg1, %c0_i32, %c0_i32_0 : i32, i32, i32
  }
  func.func @transform_4(%arg0: i32, %arg1: i32) -> (i32, i32, i32, i32) {
    %c0_i32 = arith.constant 0 : i32
    %c0_i32_0 = arith.constant 0 : i32
    %c0_i32_1 = arith.constant 0 : i32
    %c0_i32_2 = arith.constant 0 : i32
    return %arg1, %c0_i32, %c0_i32_0, %c0_i32_1 : i32, i32, i32, i32
  }
  func.func @transform_5(%arg0: i32, %arg1: i32) -> (i32, i32, i32) {
    %c0_i32 = arith.constant 0 : i32
    %c0_i32_0 = arith.constant 0 : i32
    %c0_i32_1 = arith.constant 0 : i32
    return %arg1, %c0_i32, %c0_i32_0 : i32, i32, i32
  }
  func.func @transform_6(%arg0: i32, %arg1: i32) -> (i32, i32, i32) {
    %c0_i32 = arith.constant 0 : i32
    %c0_i32_0 = arith.constant 0 : i32
    %c0_i32_1 = arith.constant 0 : i32
    return %arg1, %c0_i32, %c0_i32_0 : i32, i32, i32
  }
  func.func @transform_7(%arg0: i32, %arg1: i32) -> (i32, i32, i32) {
    %c0_i32 = arith.constant 0 : i32
    %c0_i32_0 = arith.constant 0 : i32
    %c0_i32_1 = arith.constant 0 : i32
    return %arg1, %c0_i32, %c0_i32_0 : i32, i32, i32
  }
  func.func @transform_8(%arg0: i32, %arg1: i32) -> (i32, i32, i32) {
    %c0_i32 = arith.constant 0 : i32
    %c0_i32_0 = arith.constant 0 : i32
    %c0_i32_1 = arith.constant 0 : i32
    return %arg1, %c0_i32, %c0_i32_0 : i32, i32, i32
  }
  func.func @transform_9(%arg0: i32, %arg1: i32) -> (i32, i32, i32) {
    %c0_i32 = arith.constant 0 : i32
    %c0_i32_0 = arith.constant 0 : i32
    %c0_i32_1 = arith.constant 0 : i32
    return %arg1, %c0_i32, %c0_i32_0 : i32, i32, i32
  }
  func.func @transform_10(%arg0: i32, %arg1: i32) -> (i32, i32, i32) {
    %c0_i32 = arith.constant 0 : i32
    %c0_i32_0 = arith.constant 0 : i32
    %c0_i32_1 = arith.constant 0 : i32
    return %arg1, %c0_i32, %c0_i32_0 : i32, i32, i32
  }
  func.func @transform_11(%arg0: i32, %arg1: i32) -> (i32, i32, i32) {
    %c0_i32 = arith.constant 0 : i32
    %c0_i32_0 = arith.constant 0 : i32
    %c0_i32_1 = arith.constant 0 : i32
    return %arg1, %c0_i32, %c0_i32_0 : i32, i32, i32
  }
  func.func @transform_12(%arg0: i32, %arg1: i32) -> (i32, i32, i32) {
    %c0_i32 = arith.constant 0 : i32
    %c0_i32_0 = arith.constant 0 : i32
    %c0_i32_1 = arith.constant 0 : i32
    return %arg0, %c0_i32, %c0_i32_0 : i32, i32, i32
  }
}

</mosaic_0001>

<llo_original>
// kernel: transformer_forward.1
$region0: #{transformer_forward.1}
  #allocation0 [shape = 'u32[]', space=smem, size = 0x4, offset = 0x4, fixed_abs, tag = 'smem constant byte address 0x4 - core index']
  #allocation1 [shape = 'u32[72,128]{1,0:T(1,128)}', space=vmem, size = 0x9000, scoped, tag = 'internal scratch']
  %s0 = inlined_call_operand.vmem [shape: f32[2,8,32], index: 0, kind: input, shape index: {}]
  %s1 = inlined_call_operand.vmem [shape: f32[2,1,32], index: 1, kind: input, shape index: {}]
  %s2 = inlined_call_operand.vmem [shape: f32[2,1,32], index: 2, kind: input, shape index: {}]
  %s3 = inlined_call_operand.vmem [shape: bf16[2,32,192], index: 3, kind: input, shape index: {}]
  %s4 = inlined_call_operand.vmem [shape: bf16[2,4,16,32], index: 4, kind: input, shape index: {}]
  %s5 = inlined_call_operand.vmem [shape: f32[2,1,32], index: 5, kind: input, shape index: {}]
  %s6 = inlined_call_operand.vmem [shape: f32[2,1,32], index: 6, kind: input, shape index: {}]
  %s7 = inlined_call_operand.vmem [shape: f32[2,1,32], index: 7, kind: input, shape index: {}]
  %s8 = inlined_call_operand.vmem [shape: bf16[2,32,64], index: 8, kind: input, shape index: {}]
  %s9 = inlined_call_operand.vmem [shape: f32[2,1,64], index: 9, kind: input, shape index: {}]
  %s10 = inlined_call_operand.vmem [shape: bf16[2,64,32], index: 10, kind: input, shape index: {}]
  %s11 = inlined_call_operand.vmem [shape: f32[2,1,32], index: 11, kind: input, shape index: {}]
  %s12 = inlined_call_operand.hbm [shape: f32[2,8,32], index: 12, kind: output, shape index: {}]
  %s13 = sld [smem:[#allocation0]]
  $region85: #{transformer_forward.1} parent=0
    _
  %s15 = ssub.s32 1, %s13
  %s16 = scalar_select 0, %s15, %s13
  $region1: #{transformer_forward.1} parent=0
    #allocation2 [shape = 'u8[8192]{0}', space=vmem, size = 0x2000, scoped, tag = 'output window, operand 0, single buffered']
    #allocation3 [shape = 's32[2]{0}', space=sflag, size = 0x8, scoped, tag = 'scoped memory for transformer_forward.1']
    %17 = vsyncpa [#allocation3], 0
    loop: start=0, step=1, limit=4
    $region2: #{transformer_forward.1} parent=1 // loop_pre_header
      _
    $region3: #{transformer_forward.1} parent=1 // loop_header
      %s19 = sphi 0, %s23
      %p20 = scmp.ge.s32.totalorder %s19, 4
      %s26 = sphi 0, %s38
      %s27 = sphi 0, %s34
      %s28 = sphi 0, %s26
      %s29 = sphi 0, %s27
      %s30 = sphi 0, %s28
      %s31 = sphi 0, %s29
      %s41 = sphi 0, %s43
      %s44 = sphi 0, %s41
      %s45 = sphi 0, %s44
      %s61 = sphi 0, %s45
      %s67 = sphi 0, %s69
      %s70 = sphi 0, %s67
      %s71 = sphi 0, %s70
      %s87 = sphi 0, %s71
      %s93 = sphi 0, %s95
      %s96 = sphi 0, %s93
      %s97 = sphi 0, %s96
      %s113 = sphi 0, %s97
      %s119 = sphi 0, %s121
      %s122 = sphi 0, %s119
      %s123 = sphi 0, %s122
      %s139 = sphi 0, %s123
      %s145 = sphi 0, %s147
      %s148 = sphi 0, %s145
      %s149 = sphi 0, %s148
      %s165 = sphi 0, %s149
      %s171 = sphi 0, %s173
      %s174 = sphi 0, %s171
      %s175 = sphi 0, %s174
      %s191 = sphi 0, %s175
      %s197 = sphi 0, %s199
      %s200 = sphi 0, %s197
      %s201 = sphi 0, %s200
      %s217 = sphi 0, %s201
      %s223 = sphi 0, %s225
      %s226 = sphi 0, %s223
      %s227 = sphi 0, %s226
      %s243 = sphi 0, %s227
      %s249 = sphi 0, %s251
      %s252 = sphi 0, %s249
      %s253 = sphi 0, %s252
      %s269 = sphi 0, %s253
      %s275 = sphi 0, %s277
      %s278 = sphi 0, %s275
      %s279 = sphi 0, %s278
      %s295 = sphi 0, %s279
      %s301 = sphi 0, %s303
      %s304 = sphi 0, %s301
      %s305 = sphi 0, %s304
      %s321 = sphi 0, %s305
      %s327 = sphi 0, %s329
      %s330 = sphi 0, %s327
      %s331 = sphi 0, %s330
      %s347 = sphi 0, %s331
      %s353 = sphi 0, %s355
      %s356 = sphi 0, %s353
      %s357 = sphi 0, %s356
      %s373 = sphi 0, %s357
    $region4: #{transformer_forward.1} parent=1 // loop_header_branch
      %22 = sbr.rel (%p20) target = $region8
    $region5: #{transformer_forward.1} parent=1 // loop_body
      %s24 = ssub.s32 %s19, 1
      %s25 = ssub.s32 %s19, 2
      %s32 = sadd.s32 1, %s27
      %p33 = scmp.ge.s32.totalorder %s32, 2
      %s34 = scalar_select %p33, 0, %s32
      %s35 = sadd.s32 1, %s26
      %s36 = scalar_select %p33, %s35, %s26
      %p37 = scmp.ge.s32.totalorder %s36, 1
      %s38 = scalar_select %p37, 0, %s36
      %s39 = ssub.s32 %s26, %s38
      %p40 = scmp.eq.s32.totalorder %s39, 0
      %s42 = sadd.s32 %s41, 1
      %s43 = scalar_select %p40, %s41, %s42
      %p46 = pneg %p40
      %p47 = scmp.eq.s32.totalorder %s19, 1
      %p48 = por %p46, %p47
      %p49 = scmp.ne.s32.totalorder %s41, %s44
      %p50 = scmp.eq.s32.totalorder %s19, 0
      %p51 = por %p49, %p50
      %p52 = scmp.ne.s32.totalorder %s41, %s44
      %p53 = scmp.eq.s32.totalorder %s24, 1
      %p54 = por %p52, %p53
      %p55 = scmp.ne.s32.totalorder %s44, %s45
      %p56 = scmp.eq.s32.totalorder %s24, 0
      %p57 = por %p55, %p56
      %p58 = scmp.ne.s32.totalorder %s44, %s45
      %p59 = scmp.eq.s32.totalorder %s25, 1
      %p60 = por %p58, %p59
      %p62 = scmp.ne.s32.totalorder %s45, %s61
      %p63 = scmp.eq.s32.totalorder %s25, 0
      %p64 = por %p62, %p63
      %s65 = ssub.s32 %s27, %s34
      %p66 = scmp.eq.s32.totalorder %s65, 0
      %s68 = sadd.s32 %s67, 1
      %s69 = scalar_select %p66, %s67, %s68
      %p72 = pneg %p66
      %p73 = scmp.eq.s32.totalorder %s19, 1
      %p74 = por %p72, %p73
      %p75 = scmp.ne.s32.totalorder %s67, %s70
      %p76 = scmp.eq.s32.totalorder %s19, 0
      %p77 = por %p75, %p76
      %p78 = scmp.ne.s32.totalorder %s67, %s70
      %p79 = scmp.eq.s32.totalorder %s24, 1
      %p80 = por %p78, %p79
      %p81 = scmp.ne.s32.totalorder %s70, %s71
      %p82 = scmp.eq.s32.totalorder %s24, 0
      %p83 = por %p81, %p82
      %p84 = scmp.ne.s32.totalorder %s70, %s71
      %p85 = scmp.eq.s32.totalorder %s25, 1
      %p86 = por %p84, %p85
      %p88 = scmp.ne.s32.totalorder %s71, %s87
      %p89 = scmp.eq.s32.totalorder %s25, 0
      %p90 = por %p88, %p89
      %s91 = ssub.s32 %s27, %s34
      %p92 = scmp.eq.s32.totalorder %s91, 0
      %s94 = sadd.s32 %s93, 1
      %s95 = scalar_select %p92, %s93, %s94
      %p98 = pneg %p92
      %p99 = scmp.eq.s32.totalorder %s19, 1
      %p100 = por %p98, %p99
      %p101 = scmp.ne.s32.totalorder %s93, %s96
      %p102 = scmp.eq.s32.totalorder %s19, 0
      %p103 = por %p101, %p102
      %p104 = scmp.ne.s32.totalorder %s93, %s96
      %p105 = scmp.eq.s32.totalorder %s24, 1
      %p106 = por %p104, %p105
      %p107 = scmp.ne.s32.totalorder %s96, %s97
      %p108 = scmp.eq.s32.totalorder %s24, 0
      %p109 = por %p107, %p108
      %p110 = scmp.ne.s32.totalorder %s96, %s97
      %p111 = scmp.eq.s32.totalorder %s25, 1
      %p112 = por %p110, %p111
      %p114 = scmp.ne.s32.totalorder %s97, %s113
      %p115 = scmp.eq.s32.totalorder %s25, 0
      %p116 = por %p114, %p115
      %s117 = ssub.s32 %s27, %s34
      %p118 = scmp.eq.s32.totalorder %s117, 0
      %s120 = sadd.s32 %s119, 1
      %s121 = scalar_select %p118, %s119, %s120
      %p124 = pneg %p118
      %p125 = scmp.eq.s32.totalorder %s19, 1
      %p126 = por %p124, %p125
      %p127 = scmp.ne.s32.totalorder %s119, %s122
      %p128 = scmp.eq.s32.totalorder %s19, 0
      %p129 = por %p127, %p128
      %p130 = scmp.ne.s32.totalorder %s119, %s122
      %p131 = scmp.eq.s32.totalorder %s24, 1
      %p132 = por %p130, %p131
      %p133 = scmp.ne.s32.totalorder %s122, %s123
      %p134 = scmp.eq.s32.totalorder %s24, 0
      %p135 = por %p133, %p134
      %p136 = scmp.ne.s32.totalorder %s122, %s123
      %p137 = scmp.eq.s32.totalorder %s25, 1
      %p138 = por %p136, %p137
      %p140 = scmp.ne.s32.totalorder %s123, %s139
      %p141 = scmp.eq.s32.totalorder %s25, 0
      %p142 = por %p140, %p141
      %s143 = ssub.s32 %s27, %s34
      %p144 = scmp.eq.s32.totalorder %s143, 0
      %s146 = sadd.s32 %s145, 1
      %s147 = scalar_select %p144, %s145, %s146
      %p150 = pneg %p144
      %p151 = scmp.eq.s32.totalorder %s19, 1
      %p152 = por %p150, %p151
      %p153 = scmp.ne.s32.totalorder %s145, %s148
      %p154 = scmp.eq.s32.totalorder %s19, 0
      %p155 = por %p153, %p154
      %p156 = scmp.ne.s32.totalorder %s145, %s148
      %p157 = scmp.eq.s32.totalorder %s24, 1
      %p158 = por %p156, %p157
      %p159 = scmp.ne.s32.totalorder %s148, %s149
      %p160 = scmp.eq.s32.totalorder %s24, 0
      %p161 = por %p159, %p160
      %p162 = scmp.ne.s32.totalorder %s148, %s149
      %p163 = scmp.eq.s32.totalorder %s25, 1
      %p164 = por %p162, %p163
      %p166 = scmp.ne.s32.totalorder %s149, %s165
      %p167 = scmp.eq.s32.totalorder %s25, 0
      %p168 = por %p166, %p167
      %s169 = ssub.s32 %s27, %s34
      %p170 = scmp.eq.s32.totalorder %s169, 0
      %s172 = sadd.s32 %s171, 1
      %s173 = scalar_select %p170, %s171, %s172
      %p176 = pneg %p170
      %p177 = scmp.eq.s32.totalorder %s19, 1
      %p178 = por %p176, %p177
      %p179 = scmp.ne.s32.totalorder %s171, %s174
      %p180 = scmp.eq.s32.totalorder %s19, 0
      %p181 = por %p179, %p180
      %p182 = scmp.ne.s32.totalorder %s171, %s174
      %p183 = scmp.eq.s32.totalorder %s24, 1
      %p184 = por %p182, %p183
      %p185 = scmp.ne.s32.totalorder %s174, %s175
      %p186 = scmp.eq.s32.totalorder %s24, 0
      %p187 = por %p185, %p186
      %p188 = scmp.ne.s32.totalorder %s174, %s175
      %p189 = scmp.eq.s32.totalorder %s25, 1
      %p190 = por %p188, %p189
      %p192 = scmp.ne.s32.totalorder %s175, %s191
      %p193 = scmp.eq.s32.totalorder %s25, 0
      %p194 = por %p192, %p193
      %s195 = ssub.s32 %s27, %s34
      %p196 = scmp.eq.s32.totalorder %s195, 0
      %s198 = sadd.s32 %s197, 1
      %s199 = scalar_select %p196, %s197, %s198
      %p202 = pneg %p196
      %p203 = scmp.eq.s32.totalorder %s19, 1
      %p204 = por %p202, %p203
      %p205 = scmp.ne.s32.totalorder %s197, %s200
      %p206 = scmp.eq.s32.totalorder %s19, 0
      %p207 = por %p205, %p206
      %p208 = scmp.ne.s32.totalorder %s197, %s200
      %p209 = scmp.eq.s32.totalorder %s24, 1
      %p210 = por %p208, %p209
      %p211 = scmp.ne.s32.totalorder %s200, %s201
      %p212 = scmp.eq.s32.totalorder %s24, 0
      %p213 = por %p211, %p212
      %p214 = scmp.ne.s32.totalorder %s200, %s201
      %p215 = scmp.eq.s32.totalorder %s25, 1
      %p216 = por %p214, %p215
      %p218 = scmp.ne.s32.totalorder %s201, %s217
      %p219 = scmp.eq.s32.totalorder %s25, 0
      %p220 = por %p218, %p219
      %s221 = ssub.s32 %s27, %s34
      %p222 = scmp.eq.s32.totalorder %s221, 0
      %s224 = sadd.s32 %s223, 1
      %s225 = scalar_select %p222, %s223, %s224
      %p228 = pneg %p222
      %p229 = scmp.eq.s32.totalorder %s19, 1
      %p230 = por %p228, %p229
      %p231 = scmp.ne.s32.totalorder %s223, %s226
      %p232 = scmp.eq.s32.totalorder %s19, 0
      %p233 = por %p231, %p232
      %p234 = scmp.ne.s32.totalorder %s223, %s226
      %p235 = scmp.eq.s32.totalorder %s24, 1
      %p236 = por %p234, %p235
      %p237 = scmp.ne.s32.totalorder %s226, %s227
      %p238 = scmp.eq.s32.totalorder %s24, 0
      %p239 = por %p237, %p238
      %p240 = scmp.ne.s32.totalorder %s226, %s227
      %p241 = scmp.eq.s32.totalorder %s25, 1
      %p242 = por %p240, %p241
      %p244 = scmp.ne.s32.totalorder %s227, %s243
      %p245 = scmp.eq.s32.totalorder %s25, 0
      %p246 = por %p244, %p245
      %s247 = ssub.s32 %s27, %s34
      %p248 = scmp.eq.s32.totalorder %s247, 0
      %s250 = sadd.s32 %s249, 1
      %s251 = scalar_select %p248, %s249, %s250
      %p254 = pneg %p248
      %p255 = scmp.eq.s32.totalorder %s19, 1
      %p256 = por %p254, %p255
      %p257 = scmp.ne.s32.totalorder %s249, %s252
      %p258 = scmp.eq.s32.totalorder %s19, 0
      %p259 = por %p257, %p258
      %p260 = scmp.ne.s32.totalorder %s249, %s252
      %p261 = scmp.eq.s32.totalorder %s24, 1
      %p262 = por %p260, %p261
      %p263 = scmp.ne.s32.totalorder %s252, %s253
      %p264 = scmp.eq.s32.totalorder %s24, 0
      %p265 = por %p263, %p264
      %p266 = scmp.ne.s32.totalorder %s252, %s253
      %p267 = scmp.eq.s32.totalorder %s25, 1
      %p268 = por %p266, %p267
      %p270 = scmp.ne.s32.totalorder %s253, %s269
      %p271 = scmp.eq.s32.totalorder %s25, 0
      %p272 = por %p270, %p271
      %s273 = ssub.s32 %s27, %s34
      %p274 = scmp.eq.s32.totalorder %s273, 0
      %s276 = sadd.s32 %s275, 1
      %s277 = scalar_select %p274, %s275, %s276
      %p280 = pneg %p274
      %p281 = scmp.eq.s32.totalorder %s19, 1
      %p282 = por %p280, %p281
      %p283 = scmp.ne.s32.totalorder %s275, %s278
      %p284 = scmp.eq.s32.totalorder %s19, 0
      %p285 = por %p283, %p284
      %p286 = scmp.ne.s32.totalorder %s275, %s278
      %p287 = scmp.eq.s32.totalorder %s24, 1
      %p288 = por %p286, %p287
      %p289 = scmp.ne.s32.totalorder %s278, %s279
      %p290 = scmp.eq.s32.totalorder %s24, 0
      %p291 = por %p289, %p290
      %p292 = scmp.ne.s32.totalorder %s278, %s279
      %p293 = scmp.eq.s32.totalorder %s25, 1
      %p294 = por %p292, %p293
      %p296 = scmp.ne.s32.totalorder %s279, %s295
      %p297 = scmp.eq.s32.totalorder %s25, 0
      %p298 = por %p296, %p297
      %s299 = ssub.s32 %s27, %s34
      %p300 = scmp.eq.s32.totalorder %s299, 0
      %s302 = sadd.s32 %s301, 1
      %s303 = scalar_select %p300, %s301, %s302
      %p306 = pneg %p300
      %p307 = scmp.eq.s32.totalorder %s19, 1
      %p308 = por %p306, %p307
      %p309 = scmp.ne.s32.totalorder %s301, %s304
      %p310 = scmp.eq.s32.totalorder %s19, 0
      %p311 = por %p309, %p310
      %p312 = scmp.ne.s32.totalorder %s301, %s304
      %p313 = scmp.eq.s32.totalorder %s24, 1
      %p314 = por %p312, %p313
      %p315 = scmp.ne.s32.totalorder %s304, %s305
      %p316 = scmp.eq.s32.totalorder %s24, 0
      %p317 = por %p315, %p316
      %p318 = scmp.ne.s32.totalorder %s304, %s305
      %p319 = scmp.eq.s32.totalorder %s25, 1
      %p320 = por %p318, %p319
      %p322 = scmp.ne.s32.totalorder %s305, %s321
      %p323 = scmp.eq.s32.totalorder %s25, 0
      %p324 = por %p322, %p323
      %s325 = ssub.s32 %s27, %s34
      %p326 = scmp.eq.s32.totalorder %s325, 0
      %s328 = sadd.s32 %s327, 1
      %s329 = scalar_select %p326, %s327, %s328
      %p332 = pneg %p326
      %p333 = scmp.eq.s32.totalorder %s19, 1
      %p334 = por %p332, %p333
      %p335 = scmp.ne.s32.totalorder %s327, %s330
      %p336 = scmp.eq.s32.totalorder %s19, 0
      %p337 = por %p335, %p336
      %p338 = scmp.ne.s32.totalorder %s327, %s330
      %p339 = scmp.eq.s32.totalorder %s24, 1
      %p340 = por %p338, %p339
      %p341 = scmp.ne.s32.totalorder %s330, %s331
      %p342 = scmp.eq.s32.totalorder %s24, 0
      %p343 = por %p341, %p342
      %p344 = scmp.ne.s32.totalorder %s330, %s331
      %p345 = scmp.eq.s32.totalorder %s25, 1
      %p346 = por %p344, %p345
      %p348 = scmp.ne.s32.totalorder %s331, %s347
      %p349 = scmp.eq.s32.totalorder %s25, 0
      %p350 = por %p348, %p349
      %s351 = ssub.s32 %s26, %s38
      %p352 = scmp.eq.s32.totalorder %s351, 0
      %s354 = sadd.s32 %s353, 1
      %s355 = scalar_select %p352, %s353, %s354
      %p358 = pneg %p352
      %p359 = scmp.eq.s32.totalorder %s19, 1
      %p360 = por %p358, %p359
      %p361 = scmp.ne.s32.totalorder %s353, %s356
      %p362 = scmp.eq.s32.totalorder %s19, 0
      %p363 = por %p361, %p362
      %p364 = scmp.ne.s32.totalorder %s353, %s356
      %p365 = scmp.eq.s32.totalorder %s24, 1
      %p366 = por %p364, %p365
      %p367 = scmp.ne.s32.totalorder %s356, %s357
      %p368 = scmp.eq.s32.totalorder %s24, 0
      %p369 = por %p367, %p368
      %p370 = scmp.ne.s32.totalorder %s356, %s357
      %p371 = scmp.eq.s32.totalorder %s25, 1
      %p372 = por %p370, %p371
      %p374 = scmp.ne.s32.totalorder %s357, %s373
      %p375 = scmp.eq.s32.totalorder %s25, 0
      %p376 = por %p374, %p375
      %p377 = scmp.le.s32.totalorder 1, %s19
      %p378 = scmp.lt.s32.totalorder %s19, 3
      %p379 = pnand %p377, %p378
      %p380 = pneg %p379
      // Predicated region
      $region9: #{transformer_forward.1} parent=5 // pred_check
        _
      $region10: #{transformer_forward.1} parent=5 // pred_check_branch
        %382 = sbr.rel (%p379) target = $region12
      $region11: #{transformer_forward.1} parent=5 // pred_region
        %s383 = ssub.s32 %s19, 1
        // Predicated region
        $region13: #{transformer_forward.1} parent=11 // pred_check
          %p384 = pneg %p57
        $region14: #{transformer_forward.1} parent=11 // pred_check_branch
          %386 = sbr.rel (%p384) target = $region16
        $region15: #{transformer_forward.1} parent=11 // pred_region
          %s387 = smul.u32 2, %s28
          %p388 = scmp.lt.s32.totalorder %s387, 1
          %s389 = scalar_select %p388, %s387, 1
          %s390 = smul.addr %s389, 8
          %s391 = scalar_lea.vmem %s0, %s390
          %s392 = smul.u32 2, %s28
        $region16: #{transformer_forward.1} parent=11 // pred_fallthru
          _
      $region12: #{transformer_forward.1} parent=5 // pred_fallthru
        _
      %p393 = scmp.lt.s32.totalorder %s19, 2
      // Predicated region
      $region17: #{transformer_forward.1} parent=5 // pred_check
        %p394 = pneg %p393
      $region18: #{transformer_forward.1} parent=5 // pred_check_branch
        %396 = sbr.rel (%p394) target = $region20
      $region19: #{transformer_forward.1} parent=5 // pred_region
        // Predicated region
        $region21: #{transformer_forward.1} parent=19 // pred_check
          %p397 = pneg %p77
        $region22: #{transformer_forward.1} parent=19 // pred_check_branch
          %399 = sbr.rel (%p397) target = $region24
        $region23: #{transformer_forward.1} parent=19 // pred_region
          %p400 = scmp.lt.s32.totalorder %s27, 1
          %s401 = scalar_select %p400, %s27, 1
          %s402 = scalar_lea.vmem %s1, %s401
        $region24: #{transformer_forward.1} parent=19 // pred_fallthru
          _
        // Predicated region
        $region25: #{transformer_forward.1} parent=19 // pred_check
          %p403 = pneg %p103
        $region26: #{transformer_forward.1} parent=19 // pred_check_branch
          %405 = sbr.rel (%p403) target = $region28
        $region27: #{transformer_forward.1} parent=19 // pred_region
          %p406 = scmp.lt.s32.totalorder %s27, 1
          %s407 = scalar_select %p406, %s27, 1
          %s408 = scalar_lea.vmem %s2, %s407
        $region28: #{transformer_forward.1} parent=19 // pred_fallthru
          _
        // Predicated region
        $region29: #{transformer_forward.1} parent=19 // pred_check
          %p409 = pneg %p129
        $region30: #{transformer_forward.1} parent=19 // pred_check_branch
          %411 = sbr.rel (%p409) target = $region32
        $region31: #{transformer_forward.1} parent=19 // pred_region
          %p412 = scmp.lt.s32.totalorder %s27, 1
          %s413 = scalar_select %p412, %s27, 1
          %s414 = smul.addr %s413, 8
          %s415 = smul.addr %s414, 4
          %s416 = scalar_lea.vmem %s3, %s415
        $region32: #{transformer_forward.1} parent=19 // pred_fallthru
          _
        // Predicated region
        $region33: #{transformer_forward.1} parent=19 // pred_check
          %p417 = pneg %p155
        $region34: #{transformer_forward.1} parent=19 // pred_check_branch
          %419 = sbr.rel (%p417) target = $region36
        $region35: #{transformer_forward.1} parent=19 // pred_region
          %p420 = scmp.lt.s32.totalorder %s27, 1
          %s421 = scalar_select %p420, %s27, 1
          %s422 = smul.addr %s421, 8
          %s423 = smul.addr %s422, 4
          %s424 = scalar_lea.vmem %s4, %s423
        $region36: #{transformer_forward.1} parent=19 // pred_fallthru
          _
        // Predicated region
        $region37: #{transformer_forward.1} parent=19 // pred_check
          %p425 = pneg %p181
        $region38: #{transformer_forward.1} parent=19 // pred_check_branch
          %427 = sbr.rel (%p425) target = $region40
        $region39: #{transformer_forward.1} parent=19 // pred_region
          %p428 = scmp.lt.s32.totalorder %s27, 1
          %s429 = scalar_select %p428, %s27, 1
          %s430 = scalar_lea.vmem %s5, %s429
        $region40: #{transformer_forward.1} parent=19 // pred_fallthru
          _
        // Predicated region
        $region41: #{transformer_forward.1} parent=19 // pred_check
          %p431 = pneg %p207
        $region42: #{transformer_forward.1} parent=19 // pred_check_branch
          %433 = sbr.rel (%p431) target = $region44
        $region43: #{transformer_forward.1} parent=19 // pred_region
          %p434 = scmp.lt.s32.totalorder %s27, 1
          %s435 = scalar_select %p434, %s27, 1
          %s436 = scalar_lea.vmem %s6, %s435
        $region44: #{transformer_forward.1} parent=19 // pred_fallthru
          _
        // Predicated region
        $region45: #{transformer_forward.1} parent=19 // pred_check
          %p437 = pneg %p233
        $region46: #{transformer_forward.1} parent=19 // pred_check_branch
          %439 = sbr.rel (%p437) target = $region48
        $region47: #{transformer_forward.1} parent=19 // pred_region
          %p440 = scmp.lt.s32.totalorder %s27, 1
          %s441 = scalar_select %p440, %s27, 1
          %s442 = scalar_lea.vmem %s7, %s441
        $region48: #{transformer_forward.1} parent=19 // pred_fallthru
          _
        // Predicated region
        $region49: #{transformer_forward.1} parent=19 // pred_check
          %p443 = pneg %p259
        $region50: #{transformer_forward.1} parent=19 // pred_check_branch
          %445 = sbr.rel (%p443) target = $region52
        $region51: #{transformer_forward.1} parent=19 // pred_region
          %p446 = scmp.lt.s32.totalorder %s27, 1
          %s447 = scalar_select %p446, %s27, 1
          %s448 = smul.addr %s447, 4
          %s449 = smul.addr %s448, 4
          %s450 = scalar_lea.vmem %s8, %s449
        $region52: #{transformer_forward.1} parent=19 // pred_fallthru
          _
        // Predicated region
        $region53: #{transformer_forward.1} parent=19 // pred_check
          %p451 = pneg %p285
        $region54: #{transformer_forward.1} parent=19 // pred_check_branch
          %453 = sbr.rel (%p451) target = $region56
        $region55: #{transformer_forward.1} parent=19 // pred_region
          %p454 = scmp.lt.s32.totalorder %s27, 1
          %s455 = scalar_select %p454, %s27, 1
          %s456 = scalar_lea.vmem %s9, %s455
        $region56: #{transformer_forward.1} parent=19 // pred_fallthru
          _
        // Predicated region
        $region57: #{transformer_forward.1} parent=19 // pred_check
          %p457 = pneg %p311
        $region58: #{transformer_forward.1} parent=19 // pred_check_branch
          %459 = sbr.rel (%p457) target = $region60
        $region59: #{transformer_forward.1} parent=19 // pred_region
          %p460 = scmp.lt.s32.totalorder %s27, 1
          %s461 = scalar_select %p460, %s27, 1
          %s462 = smul.addr %s461, 8
          %s463 = smul.addr %s462, 4
          %s464 = scalar_lea.vmem %s10, %s463
        $region60: #{transformer_forward.1} parent=19 // pred_fallthru
          _
        // Predicated region
        $region61: #{transformer_forward.1} parent=19 // pred_check
          %p465 = pneg %p337
        $region62: #{transformer_forward.1} parent=19 // pred_check_branch
          %467 = sbr.rel (%p465) target = $region64
        $region63: #{transformer_forward.1} parent=19 // pred_region
          %p468 = scmp.lt.s32.totalorder %s27, 1
          %s469 = scalar_select %p468, %s27, 1
          %s470 = scalar_lea.vmem %s11, %s469
        $region64: #{transformer_forward.1} parent=19 // pred_fallthru
          _
      $region20: #{transformer_forward.1} parent=5 // pred_fallthru
        _
      %p471 = scmp.le.s32.totalorder 1, %s19
      %p472 = scmp.lt.s32.totalorder %s19, 3
      %p473 = pnand %p471, %p472
      %p474 = pneg %p473
      // Predicated region
      $region65: #{transformer_forward.1} parent=5 // pred_check
        _
      $region66: #{transformer_forward.1} parent=5 // pred_check_branch
        %476 = sbr.rel (%p473) target = $region68
      $region67: #{transformer_forward.1} parent=5 // pred_region
        %s477 = ssub.s32 %s19, 1
        %s478 = smul.u32 2, %s28
        %p479 = scmp.lt.s32.totalorder %s478, 1
        %s480 = scalar_select %p479, %s478, 1
        %s481 = smul.addr %s480, 8
        %s482 = scalar_lea.vmem %s0, %s481
        %p483 = pneg %p57
        %p484 = pneg %p54
        %p485 = scmp.lt.s32.totalorder %s29, 1
        %s486 = scalar_select %p485, %s29, 1
        %s487 = scalar_lea.vmem %s1, %s486
        %p488 = pneg %p83
        %p489 = pneg %p80
        %p490 = scmp.lt.s32.totalorder %s29, 1
        %s491 = scalar_select %p490, %s29, 1
        %s492 = scalar_lea.vmem %s2, %s491
        %p493 = pneg %p109
        %p494 = pneg %p106
        %p495 = scmp.lt.s32.totalorder %s29, 1
        %s496 = scalar_select %p495, %s29, 1
        %s497 = smul.addr %s496, 8
        %s498 = smul.addr %s497, 4
        %s499 = scalar_lea.vmem %s3, %s498
        %p500 = pneg %p135
        %p501 = pneg %p132
        %p502 = scmp.lt.s32.totalorder %s29, 1
        %s503 = scalar_select %p502, %s29, 1
        %s504 = smul.addr %s503, 8
        %s505 = smul.addr %s504, 4
        %s506 = scalar_lea.vmem %s4, %s505
        %p507 = pneg %p161
        %p508 = pneg %p158
        %p509 = scmp.lt.s32.totalorder %s29, 1
        %s510 = scalar_select %p509, %s29, 1
        %s511 = scalar_lea.vmem %s5, %s510
        %p512 = pneg %p187
        %p513 = pneg %p184
        %p514 = scmp.lt.s32.totalorder %s29, 1
        %s515 = scalar_select %p514, %s29, 1
        %s516 = scalar_lea.vmem %s6, %s515
        %p517 = pneg %p213
        %p518 = pneg %p210
        %p519 = scmp.lt.s32.totalorder %s29, 1
        %s520 = scalar_select %p519, %s29, 1
        %s521 = scalar_lea.vmem %s7, %s520
        %p522 = pneg %p239
        %p523 = pneg %p236
        %p524 = scmp.lt.s32.totalorder %s29, 1
        %s525 = scalar_select %p524, %s29, 1
        %s526 = smul.addr %s525, 4
        %s527 = smul.addr %s526, 4
        %s528 = scalar_lea.vmem %s8, %s527
        %p529 = pneg %p265
        %p530 = pneg %p262
        %p531 = scmp.lt.s32.totalorder %s29, 1
        %s532 = scalar_select %p531, %s29, 1
        %s533 = scalar_lea.vmem %s9, %s532
        %p534 = pneg %p291
        %p535 = pneg %p288
        %p536 = scmp.lt.s32.totalorder %s29, 1
        %s537 = scalar_select %p536, %s29, 1
        %s538 = smul.addr %s537, 8
        %s539 = smul.addr %s538, 4
        %s540 = scalar_lea.vmem %s10, %s539
        %p541 = pneg %p317
        %p542 = pneg %p314
        %p543 = scmp.lt.s32.totalorder %s29, 1
        %s544 = scalar_select %p543, %s29, 1
        %s545 = scalar_lea.vmem %s11, %s544
        %p546 = pneg %p343
        %p547 = pneg %p340
        %p548 = pneg %p369
        %p549 = pneg %p366
        %s550 = smul.u32 2, %s28
        %p551 = scmp.lt.s32.totalorder %s550, 1
        %s552 = scalar_select %p551, %s550, 1
        %s553 = smul.addr %s552, 8
        %s554 = scalar_lea.vmem %s0, %s553
        %s555 = smul.u32 2, %s28
        %p556 = scmp.lt.s32.totalorder %s29, 1
        %s557 = scalar_select %p556, %s29, 1
        %s558 = scalar_lea.vmem %s1, %s557
        %p559 = scmp.lt.s32.totalorder %s29, 1
        %s560 = scalar_select %p559, %s29, 1
        %s561 = scalar_lea.vmem %s2, %s560
        %p562 = scmp.lt.s32.totalorder %s29, 1
        %s563 = scalar_select %p562, %s29, 1
        %s564 = smul.addr %s563, 8
        %s565 = smul.addr %s564, 4
        %s566 = scalar_lea.vmem %s3, %s565
        %p567 = scmp.lt.s32.totalorder %s29, 1
        %s568 = scalar_select %p567, %s29, 1
        %s569 = smul.addr %s568, 8
        %s570 = smul.addr %s569, 4
        %s571 = scalar_lea.vmem %s4, %s570
        %p572 = scmp.lt.s32.totalorder %s29, 1
        %s573 = scalar_select %p572, %s29, 1
        %s574 = scalar_lea.vmem %s5, %s573
        %p575 = scmp.lt.s32.totalorder %s29, 1
        %s576 = scalar_select %p575, %s29, 1
        %s577 = scalar_lea.vmem %s6, %s576
        %p578 = scmp.lt.s32.totalorder %s29, 1
        %s579 = scalar_select %p578, %s29, 1
        %s580 = scalar_lea.vmem %s7, %s579
        %p581 = scmp.lt.s32.totalorder %s29, 1
        %s582 = scalar_select %p581, %s29, 1
        %s583 = smul.addr %s582, 4
        %s584 = smul.addr %s583, 4
        %s585 = scalar_lea.vmem %s8, %s584
        %p586 = scmp.lt.s32.totalorder %s29, 1
        %s587 = scalar_select %p586, %s29, 1
        %s588 = scalar_lea.vmem %s9, %s587
        %p589 = scmp.lt.s32.totalorder %s29, 1
        %s590 = scalar_select %p589, %s29, 1
        %s591 = smul.addr %s590, 8
        %s592 = smul.addr %s591, 4
        %s593 = scalar_lea.vmem %s10, %s592
        %p594 = scmp.lt.s32.totalorder %s29, 1
        %s595 = scalar_select %p594, %s29, 1
        %s596 = scalar_lea.vmem %s11, %s595
        %s597 = smul.u32 2, %s28
        %p599 = scmp.eq.s32.totalorder %s29, 0
        // Predicated region
        $region69: #{transformer_forward.1} parent=67 // pred_check
          %p600 = pneg %p599
        $region70: #{transformer_forward.1} parent=67 // pred_check_branch
          %602 = sbr.rel (%p600) target = $region72
        $region71: #{transformer_forward.1} parent=67 // pred_region
          %v603 = vld [vmem:[%s554] sm:$0xff]
          %v604 = vld [vmem:[%s554 + $0x8] sm:$0xff]
          %vm605 = vcmask 261120
          %606 = vst.msk [vmem:[#allocation2] sm:$0xff] %vm605, %v603
          %607 = vst.msk [vmem:[#allocation2 + $0x8] sm:$0xff] %vm605, %v604
        $region72: #{transformer_forward.1} parent=67 // pred_fallthru
          _
        %v608 = vld [vmem:[#allocation2] sm:$0xff]
        %v609 = vld [vmem:[#allocation2 + $0x8] sm:$0xff]
        %v610 = vld [vmem:[%s558] sm:$0x1]
        %v611 = vld [vmem:[%s561] sm:$0x1]
        %vm612 = vcmask 261120
        %v613 = vsel %vm612, %v608, 0.0
        %614 = vadd.xlane.f32.xlu0 %v613
        %v615 = vpop.xlane.xlu0 %614
        %v616 = vsel %vm612, %v609, 0.0
        %617 = vadd.xlane.f32.xlu0 %v616
        %v618 = vpop.xlane.xlu0 %617
        %v619 = vrcp.pop 32.0
        %v620 = vmul.f32 32.0, %v619
        %v621 = vsub.f32 1.0, %v620
        %v622 = vmul.f32 %v619, %v621
        %v623 = vadd.f32 %v619, %v622
        %vm624 = vweird.f32 %v619
        %v625 = vsel %vm624, %v619, %v623
        %v626 = vmul.f32 %v615, %v625
        %v627 = vmul.f32 %v618, %v625
        %v628 = vsub.f32 %v608, %v626
        %v629 = vsub.f32 %v609, %v627
        %v630 = vmul.f32 %v628, %v628
        %v631 = vmul.f32 %v629, %v629
        %v632 = vsel %vm612, %v630, 0.0
        %633 = vadd.xlane.f32.xlu0 %v632
        %v634 = vpop.xlane.xlu0 %633
        %v635 = vsel %vm612, %v631, 0.0
        %636 = vadd.xlane.f32.xlu0 %v635
        %v637 = vpop.xlane.xlu0 %636
        %v638 = vmul.f32 %v634, %v625
        %v639 = vmul.f32 %v637, %v625
        %v640 = vadd.f32 %v638, 1e-05
        %v641 = vadd.f32 %v639, 1e-05
        %v642 = vrsqrt.pop %v640
        %v643 = vmul.f32 %v642, %v640
        %v644 = vmul.f32 %v643, %v642
        %v645 = vmul.f32 0.5, %v644
        %v646 = vsub.f32 1.5, %v645
        %v647 = vmul.f32 %v642, %v646
        %vm648 = vweird.f32 %v640
        %vm649 = vweird.f32 %v642
        %vm650 = vmor %vm648, %vm649
        %v651 = vsel %vm650, %v642, %v647
        %v652 = vrsqrt.pop %v641
        %v653 = vmul.f32 %v652, %v641
        %v654 = vmul.f32 %v653, %v652
        %v655 = vmul.f32 0.5, %v654
        %v656 = vsub.f32 1.5, %v655
        %v657 = vmul.f32 %v652, %v656
        %vm658 = vweird.f32 %v641
        %vm659 = vweird.f32 %v652
        %vm660 = vmor %vm658, %vm659
        %v661 = vsel %vm660, %v652, %v657
        %v662 = vmul.f32 %v628, %v651
        %v663 = vmul.f32 %v629, %v661
        %v665 = vperm.slane %v610, 0
        %v667 = vmul.f32 %v662, %v665
        %v668 = vmul.f32 %v663, %v665
        %v670 = vperm.slane %v611, 0
        %v672 = vadd.f32 %v667, %v670
        %v673 = vadd.f32 %v668, %v670
        %v674 = vpack.c.bf16 %v673, %v672
        %v675 = vld [vmem:[%s566] sm:$0xff]
        %v676 = vld [vmem:[%s566 + $0x8] sm:$0xff]
        %v677 = vld [vmem:[%s566 + $0x10] sm:$0xff]
        %v678 = vld [vmem:[%s566 + $0x18] sm:$0xff]
        %v683 = vunpack.c.l.b16 %v675
        %v684 = vunpack.c.h.b16 %v675
        %v685 = vunpack.c.l.b16 %v676
        %v686 = vunpack.c.h.b16 %v676
        %v687 = vunpack.c.l.b16 %v677
        %v688 = vunpack.c.h.b16 %v677
        %v689 = vunpack.c.l.b16 %v678
        %v690 = vunpack.c.h.b16 %v678
        %v691 = vpack.c.b16 %v685, %v683
        %v692 = vpack.c.b16 %v686, %v684
        %v693 = vpack.c.b16 %v689, %v687
        %v694 = vpack.c.b16 %v690, %v688
        %v700 = vsel %vm612, %v674, 0
        %702 = vmatpush.bf16.msra.mxu0 0
        %703 = vmatpush.bf16.msra.mxu0 0
        %704 = vmatpush.bf16.msra.mxu0 0
        %705 = vmatpush.bf16.msra.mxu0 0
        %706 = vmatpush.bf16.msra.mxu0 0
        %707 = vmatpush.bf16.msra.mxu0 0
        %708 = vmatpush.bf16.msra.mxu0 %v693
        %709 = vmatpush.bf16.msra.mxu0 %v691
        %710 = vmatmul.bf16.gmra.mxu0 %v700
        %v711 = vpop.f32.mrf.mxu0
        %v712 = vadd.f32 0.0, %v711
        %v713 = vpop.f32.mrf.mxu0
        %v714 = vadd.f32 0.0, %v713
        %715 = vdwg.mxu0
        %716 = vmatpush.bf16.msra.mxu0 0
        %717 = vmatpush.bf16.msra.mxu0 0
        %718 = vmatpush.bf16.msra.mxu0 0
        %719 = vmatpush.bf16.msra.mxu0 0
        %720 = vmatpush.bf16.msra.mxu0 0
        %721 = vmatpush.bf16.msra.mxu0 0
        %722 = vmatpush.bf16.msra.mxu0 %v694
        %723 = vmatpush.bf16.msra.mxu0 %v692
        %724 = vmatmul.bf16.gmra.mxu0 %v700
        %v725 = vpop.f32.mrf.mxu0
        %v726 = vadd.f32 0.0, %v725
        %v727 = vpop.f32.mrf.mxu0
        %v728 = vadd.f32 0.0, %v727
        %729 = vdwg.mxu0
        %732 = vrot.lane.b32.xlu0 %v712, 112
        %v733 = vpop.permute.xlu0 %732
        %734 = vrot.lane.b32.xlu0 %v714, 112
        %v735 = vpop.permute.xlu0 %734
        %738 = vrot.lane.b32.xlu0 %v712, 96
        %v739 = vpop.permute.xlu0 %738
        %740 = vrot.lane.b32.xlu0 %v714, 96
        %v741 = vpop.permute.xlu0 %740
        %744 = vrot.lane.b32.xlu0 %v712, 80
        %v745 = vpop.permute.xlu0 %744
        %746 = vrot.lane.b32.xlu0 %v714, 80
        %v747 = vpop.permute.xlu0 %746
        %750 = vrot.lane.b32.xlu0 %v712, 64
        %v751 = vpop.permute.xlu0 %750
        %752 = vrot.lane.b32.xlu0 %v714, 64
        %v753 = vpop.permute.xlu0 %752
        %756 = vrot.lane.b32.xlu0 %v712, 48
        %v757 = vpop.permute.xlu0 %756
        %758 = vrot.lane.b32.xlu0 %v714, 48
        %v759 = vpop.permute.xlu0 %758
        %762 = vrot.lane.b32.xlu0 %v712, 32
        %v763 = vpop.permute.xlu0 %762
        %764 = vrot.lane.b32.xlu0 %v714, 32
        %v765 = vpop.permute.xlu0 %764
        %768 = vrot.lane.b32.xlu0 %v712, 16
        %v769 = vpop.permute.xlu0 %768
        %770 = vrot.lane.b32.xlu0 %v714, 16
        %v771 = vpop.permute.xlu0 %770
        %776 = vrot.lane.b32.xlu0 %v726, 112
        %v777 = vpop.permute.xlu0 %776
        %778 = vrot.lane.b32.xlu0 %v728, 112
        %v779 = vpop.permute.xlu0 %778
        %782 = vrot.lane.b32.xlu0 %v726, 96
        %v783 = vpop.permute.xlu0 %782
        %784 = vrot.lane.b32.xlu0 %v728, 96
        %v785 = vpop.permute.xlu0 %784
        %788 = vrot.lane.b32.xlu0 %v726, 80
        %v789 = vpop.permute.xlu0 %788
        %790 = vrot.lane.b32.xlu0 %v728, 80
        %v791 = vpop.permute.xlu0 %790
        %v794 = vrot.slane %v739, 4
        %vm795 = vcmask 1047556
        %v796 = vsel %vm795, %v794, %v712
        %v797 = vrot.slane %v712, 4
        %v798 = vsel %vm795, %v739, %v797
        %v800 = vunpack.c.l.s4 1983009808
        %v801 = vunpack.c.0.s8 %v800
        %v802 = vperm.slane %v796, %v801
        %v804 = vunpack.c.l.s4 1983009808
        %v805 = vunpack.c.0.s8 %v804
        %v806 = vperm.slane %v798, %v805
        %v807 = vrot.slane %v745, 4
        %v808 = vsel %vm795, %v807, %v733
        %v809 = vrot.slane %v733, 4
        %v810 = vsel %vm795, %v745, %v809
        %v812 = vunpack.c.l.s4 1983009808
        %v813 = vunpack.c.0.s8 %v812
        %v814 = vperm.slane %v808, %v813
        %v816 = vunpack.c.l.s4 1983009808
        %v817 = vunpack.c.0.s8 %v816
        %v818 = vperm.slane %v810, %v817
        %v819 = vrot.slane %v763, 4
        %v820 = vsel %vm795, %v819, %v751
        %v821 = vrot.slane %v751, 4
        %v822 = vsel %vm795, %v763, %v821
        %v824 = vunpack.c.l.s4 1983009808
        %v825 = vunpack.c.0.s8 %v824
        %v826 = vperm.slane %v820, %v825
        %v828 = vunpack.c.l.s4 1983009808
        %v829 = vunpack.c.0.s8 %v828
        %v830 = vperm.slane %v822, %v829
        %v831 = vrot.slane %v769, 4
        %v832 = vsel %vm795, %v831, %v757
        %v833 = vrot.slane %v757, 4
        %v834 = vsel %vm795, %v769, %v833
        %v836 = vunpack.c.l.s4 1983009808
        %v837 = vunpack.c.0.s8 %v836
        %v838 = vperm.slane %v832, %v837
        %v840 = vunpack.c.l.s4 1983009808
        %v841 = vunpack.c.0.s8 %v840
        %v842 = vperm.slane %v834, %v841
        %v843 = vrot.slane %v814, 4
        %v844 = vsel %vm795, %v843, %v802
        %v845 = vrot.slane %v802, 4
        %v846 = vsel %vm795, %v814, %v845
        %v848 = vunpack.c.l.s4 1934713408
        %v849 = vunpack.c.0.s8 %v848
        %v850 = vperm.slane %v844, %v849
        %v852 = vunpack.c.l.s4 1934713408
        %v853 = vunpack.c.0.s8 %v852
        %v854 = vperm.slane %v846, %v853
        %v855 = vrot.slane %v818, 4
        %v856 = vsel %vm795, %v855, %v806
        %v857 = vrot.slane %v806, 4
        %v858 = vsel %vm795, %v818, %v857
        %v860 = vunpack.c.l.s4 1934713408
        %v861 = vunpack.c.0.s8 %v860
        %v862 = vperm.slane %v856, %v861
        %v864 = vunpack.c.l.s4 1934713408
        %v865 = vunpack.c.0.s8 %v864
        %v866 = vperm.slane %v858, %v865
        %v867 = vrot.slane %v838, 4
        %v868 = vsel %vm795, %v867, %v826
        %v869 = vrot.slane %v826, 4
        %v870 = vsel %vm795, %v838, %v869
        %v872 = vunpack.c.l.s4 1934713408
        %v873 = vunpack.c.0.s8 %v872
        %v874 = vperm.slane %v868, %v873
        %v876 = vunpack.c.l.s4 1934713408
        %v877 = vunpack.c.0.s8 %v876
        %v878 = vperm.slane %v870, %v877
        %v879 = vrot.slane %v842, 4
        %v880 = vsel %vm795, %v879, %v830
        %v881 = vrot.slane %v830, 4
        %v882 = vsel %vm795, %v842, %v881
        %v884 = vunpack.c.l.s4 1934713408
        %v885 = vunpack.c.0.s8 %v884
        %v886 = vperm.slane %v880, %v885
        %v888 = vunpack.c.l.s4 1934713408
        %v889 = vunpack.c.0.s8 %v888
        %v890 = vperm.slane %v882, %v889
        %v891 = vrot.slane %v874, 4
        %v892 = vsel %vm795, %v891, %v850
        %v893 = vrot.slane %v850, 4
        %v894 = vsel %vm795, %v874, %v893
        %v895 = vrot.slane %v878, 4
        %v896 = vsel %vm795, %v895, %v854
        %v897 = vrot.slane %v854, 4
        %v898 = vsel %vm795, %v878, %v897
        %v899 = vrot.slane %v886, 4
        %v900 = vsel %vm795, %v899, %v862
        %v901 = vrot.slane %v862, 4
        %v902 = vsel %vm795, %v886, %v901
        %v903 = vrot.slane %v890, 4
        %v904 = vsel %vm795, %v903, %v866
        %v905 = vrot.slane %v866, 4
        %v906 = vsel %vm795, %v890, %v905
        %v907 = vrot.slane %v783, 4
        %v908 = vsel %vm795, %v907, %v726
        %v909 = vrot.slane %v726, 4
        %v910 = vsel %vm795, %v783, %v909
        %v912 = vunpack.c.l.s4 1983009808
        %v913 = vunpack.c.0.s8 %v912
        %v914 = vperm.slane %v908, %v913
        %v916 = vunpack.c.l.s4 1983009808
        %v917 = vunpack.c.0.s8 %v916
        %v918 = vperm.slane %v910, %v917
        %v919 = vrot.slane %v789, 4
        %v920 = vsel %vm795, %v919, %v777
        %v921 = vrot.slane %v777, 4
        %v922 = vsel %vm795, %v789, %v921
        %v924 = vunpack.c.l.s4 1983009808
        %v925 = vunpack.c.0.s8 %v924
        %v926 = vperm.slane %v920, %v925
        %v928 = vunpack.c.l.s4 1983009808
        %v929 = vunpack.c.0.s8 %v928
        %v930 = vperm.slane %v922, %v929
        %v931 = vrot.slane %v926, 4
        %v932 = vsel %vm795, %v931, %v914
        %v933 = vrot.slane %v914, 4
        %v934 = vsel %vm795, %v926, %v933
        %v936 = vunpack.c.l.s4 1934713408
        %v937 = vunpack.c.0.s8 %v936
        %v938 = vperm.slane %v932, %v937
        %v940 = vunpack.c.l.s4 1934713408
        %v941 = vunpack.c.0.s8 %v940
        %v942 = vperm.slane %v934, %v941
        %v943 = vrot.slane %v930, 4
        %v944 = vsel %vm795, %v943, %v918
        %v945 = vrot.slane %v918, 4
        %v946 = vsel %vm795, %v930, %v945
        %v948 = vunpack.c.l.s4 1934713408
        %v949 = vunpack.c.0.s8 %v948
        %v950 = vperm.slane %v944, %v949
        %v952 = vunpack.c.l.s4 1934713408
        %v953 = vunpack.c.0.s8 %v952
        %v954 = vperm.slane %v946, %v953
        %v955 = vrot.slane %v938, 4
        %v956 = vsel %vm795, 0.0, %v955
        %v957 = vrot.slane %v942, 4
        %v958 = vsel %vm795, 0.0, %v957
        %v959 = vrot.slane %v950, 4
        %v960 = vsel %vm795, 0.0, %v959
        %v961 = vrot.slane %v954, 4
        %v962 = vsel %vm795, 0.0, %v961
        %v963 = vrot.slane %v741, 4
        %v964 = vsel %vm795, %v963, %v714
        %v965 = vrot.slane %v714, 4
        %v966 = vsel %vm795, %v741, %v965
        %v968 = vunpack.c.l.s4 1983009808
        %v969 = vunpack.c.0.s8 %v968
        %v970 = vperm.slane %v964, %v969
        %v972 = vunpack.c.l.s4 1983009808
        %v973 = vunpack.c.0.s8 %v972
        %v974 = vperm.slane %v966, %v973
        %v975 = vrot.slane %v747, 4
        %v976 = vsel %vm795, %v975, %v735
        %v977 = vrot.slane %v735, 4
        %v978 = vsel %vm795, %v747, %v977
        %v980 = vunpack.c.l.s4 1983009808
        %v981 = vunpack.c.0.s8 %v980
        %v982 = vperm.slane %v976, %v981
        %v984 = vunpack.c.l.s4 1983009808
        %v985 = vunpack.c.0.s8 %v984
        %v986 = vperm.slane %v978, %v985
        %v987 = vrot.slane %v765, 4
        %v988 = vsel %vm795, %v987, %v753
        %v989 = vrot.slane %v753, 4
        %v990 = vsel %vm795, %v765, %v989
        %v992 = vunpack.c.l.s4 1983009808
        %v993 = vunpack.c.0.s8 %v992
        %v994 = vperm.slane %v988, %v993
        %v996 = vunpack.c.l.s4 1983009808
        %v997 = vunpack.c.0.s8 %v996
        %v998 = vperm.slane %v990, %v997
        %v999 = vrot.slane %v771, 4
        %v1000 = vsel %vm795, %v999, %v759
        %v1001 = vrot.slane %v759, 4
        %v1002 = vsel %vm795, %v771, %v1001
        %v1004 = vunpack.c.l.s4 1983009808
        %v1005 = vunpack.c.0.s8 %v1004
        %v1006 = vperm.slane %v1000, %v1005
        %v1008 = vunpack.c.l.s4 1983009808
        %v1009 = vunpack.c.0.s8 %v1008
        %v1010 = vperm.slane %v1002, %v1009
        %v1011 = vrot.slane %v982, 4
        %v1012 = vsel %vm795, %v1011, %v970
        %v1013 = vrot.slane %v970, 4
        %v1014 = vsel %vm795, %v982, %v1013
        %v1016 = vunpack.c.l.s4 1934713408
        %v1017 = vunpack.c.0.s8 %v1016
        %v1018 = vperm.slane %v1012, %v1017
        %v1020 = vunpack.c.l.s4 1934713408
        %v1021 = vunpack.c.0.s8 %v1020
        %v1022 = vperm.slane %v1014, %v1021
        %v1023 = vrot.slane %v986, 4
        %v1024 = vsel %vm795, %v1023, %v974
        %v1025 = vrot.slane %v974, 4
        %v1026 = vsel %vm795, %v986, %v1025
        %v1028 = vunpack.c.l.s4 1934713408
        %v1029 = vunpack.c.0.s8 %v1028
        %v1030 = vperm.slane %v1024, %v1029
        %v1032 = vunpack.c.l.s4 1934713408
        %v1033 = vunpack.c.0.s8 %v1032
        %v1034 = vperm.slane %v1026, %v1033
        %v1035 = vrot.slane %v1006, 4
        %v1036 = vsel %vm795, %v1035, %v994
        %v1037 = vrot.slane %v994, 4
        %v1038 = vsel %vm795, %v1006, %v1037
        %v1040 = vunpack.c.l.s4 1934713408
        %v1041 = vunpack.c.0.s8 %v1040
        %v1042 = vperm.slane %v1036, %v1041
        %v1044 = vunpack.c.l.s4 1934713408
        %v1045 = vunpack.c.0.s8 %v1044
        %v1046 = vperm.slane %v1038, %v1045
        %v1047 = vrot.slane %v1010, 4
        %v1048 = vsel %vm795, %v1047, %v998
        %v1049 = vrot.slane %v998, 4
        %v1050 = vsel %vm795, %v1010, %v1049
        %v1052 = vunpack.c.l.s4 1934713408
        %v1053 = vunpack.c.0.s8 %v1052
        %v1054 = vperm.slane %v1048, %v1053
        %v1056 = vunpack.c.l.s4 1934713408
        %v1057 = vunpack.c.0.s8 %v1056
        %v1058 = vperm.slane %v1050, %v1057
        %v1059 = vrot.slane %v1042, 4
        %v1060 = vsel %vm795, %v1059, %v1018
        %v1061 = vrot.slane %v1018, 4
        %v1062 = vsel %vm795, %v1042, %v1061
        %v1063 = vrot.slane %v1046, 4
        %v1064 = vsel %vm795, %v1063, %v1022
        %v1065 = vrot.slane %v1022, 4
        %v1066 = vsel %vm795, %v1046, %v1065
        %v1067 = vrot.slane %v1054, 4
        %v1068 = vsel %vm795, %v1067, %v1030
        %v1069 = vrot.slane %v1030, 4
        %v1070 = vsel %vm795, %v1054, %v1069
        %v1071 = vrot.slane %v1058, 4
        %v1072 = vsel %vm795, %v1071, %v1034
        %v1073 = vrot.slane %v1034, 4
        %v1074 = vsel %vm795, %v1058, %v1073
        %v1075 = vrot.slane %v785, 4
        %v1076 = vsel %vm795, %v1075, %v728
        %v1077 = vrot.slane %v728, 4
        %v1078 = vsel %vm795, %v785, %v1077
        %v1080 = vunpack.c.l.s4 1983009808
        %v1081 = vunpack.c.0.s8 %v1080
        %v1082 = vperm.slane %v1076, %v1081
        %v1084 = vunpack.c.l.s4 1983009808
        %v1085 = vunpack.c.0.s8 %v1084
        %v1086 = vperm.slane %v1078, %v1085
        %v1087 = vrot.slane %v791, 4
        %v1088 = vsel %vm795, %v1087, %v779
        %v1089 = vrot.slane %v779, 4
        %v1090 = vsel %vm795, %v791, %v1089
        %v1092 = vunpack.c.l.s4 1983009808
        %v1093 = vunpack.c.0.s8 %v1092
        %v1094 = vperm.slane %v1088, %v1093
        %v1096 = vunpack.c.l.s4 1983009808
        %v1097 = vunpack.c.0.s8 %v1096
        %v1098 = vperm.slane %v1090, %v1097
        %v1099 = vrot.slane %v1094, 4
        %v1100 = vsel %vm795, %v1099, %v1082
        %v1101 = vrot.slane %v1082, 4
        %v1102 = vsel %vm795, %v1094, %v1101
        %v1104 = vunpack.c.l.s4 1934713408
        %v1105 = vunpack.c.0.s8 %v1104
        %v1106 = vperm.slane %v1100, %v1105
        %v1108 = vunpack.c.l.s4 1934713408
        %v1109 = vunpack.c.0.s8 %v1108
        %v1110 = vperm.slane %v1102, %v1109
        %v1111 = vrot.slane %v1098, 4
        %v1112 = vsel %vm795, %v1111, %v1086
        %v1113 = vrot.slane %v1086, 4
        %v1114 = vsel %vm795, %v1098, %v1113
        %v1116 = vunpack.c.l.s4 1934713408
        %v1117 = vunpack.c.0.s8 %v1116
        %v1118 = vperm.slane %v1112, %v1117
        %v1120 = vunpack.c.l.s4 1934713408
        %v1121 = vunpack.c.0.s8 %v1120
        %v1122 = vperm.slane %v1114, %v1121
        %v1123 = vrot.slane %v1106, 4
        %v1124 = vsel %vm795, 0.0, %v1123
        %v1125 = vrot.slane %v1110, 4
        %v1126 = vsel %vm795, 0.0, %v1125
        %v1127 = vrot.slane %v1118, 4
        %v1128 = vsel %vm795, 0.0, %v1127
        %v1129 = vrot.slane %v1122, 4
        %v1130 = vsel %vm795, 0.0, %v1129
        %v1131 = vpack.c.bf16 %v892, %v892
        %v1132 = vpack.c.bf16 %v938, %v938
        %v1133 = vpack.c.bf16 %v894, %v894
        %v1134 = vpack.c.bf16 %v956, %v956
        %v1135 = vpack.c.bf16 %v896, %v896
        %v1136 = vpack.c.bf16 %v942, %v942
        %v1137 = vpack.c.bf16 %v898, %v898
        %v1138 = vpack.c.bf16 %v958, %v958
        %v1139 = vpack.c.bf16 %v900, %v900
        %v1140 = vpack.c.bf16 %v950, %v950
        %v1141 = vpack.c.bf16 %v902, %v902
        %v1142 = vpack.c.bf16 %v960, %v960
        %v1143 = vpack.c.bf16 %v904, %v904
        %v1144 = vpack.c.bf16 %v954, %v954
        %v1145 = vpack.c.bf16 %v906, %v906
        %v1146 = vpack.c.bf16 %v962, %v962
        %v1147 = vpack.c.bf16 %v1060, %v1060
        %v1148 = vpack.c.bf16 %v1106, %v1106
        %v1149 = vpack.c.bf16 %v1062, %v1062
        %v1150 = vpack.c.bf16 %v1124, %v1124
        %v1151 = vpack.c.bf16 %v1064, %v1064
        %v1152 = vpack.c.bf16 %v1110, %v1110
        %v1153 = vpack.c.bf16 %v1066, %v1066
        %v1154 = vpack.c.bf16 %v1126, %v1126
        %v1155 = vpack.c.bf16 %v1068, %v1068
        %v1156 = vpack.c.bf16 %v1118, %v1118
        %v1157 = vpack.c.bf16 %v1070, %v1070
        %v1158 = vpack.c.bf16 %v1128, %v1128
        %v1159 = vpack.c.bf16 %v1072, %v1072
        %v1160 = vpack.c.bf16 %v1122, %v1122
        %v1161 = vpack.c.bf16 %v1074, %v1074
        %v1162 = vpack.c.bf16 %v1130, %v1130
        %v1163 = vrot.slane %v1139, 4
        %vm1164 = vcmask 1047556
        %v1165 = vsel %vm1164, %v1163, %v1131
        %v1167 = vunpack.c.l.s4 1983009808
        %v1168 = vunpack.c.0.s8 %v1167
        %v1169 = vperm.slane %v1165, %v1168
        %v1170 = vrot.slane %v1143, 4
        %v1171 = vsel %vm1164, %v1170, %v1135
        %v1173 = vunpack.c.l.s4 1983009808
        %v1174 = vunpack.c.0.s8 %v1173
        %v1175 = vperm.slane %v1171, %v1174
        %v1176 = vrot.slane %v1175, 4
        %v1177 = vsel %vm1164, %v1176, %v1169
        %v1178 = vrot.slane %v1169, 4
        %v1179 = vsel %vm1164, %v1175, %v1178
        %v1181 = vunpack.c.l.s4 1934713408
        %v1182 = vunpack.c.0.s8 %v1181
        %v1183 = vperm.slane %v1177, %v1182
        %v1185 = vunpack.c.l.s4 1934713408
        %v1186 = vunpack.c.0.s8 %v1185
        %v1187 = vperm.slane %v1179, %v1186
        %v1188 = vrot.slane %v1183, 4
        %v1189 = vsel %vm1164, 0, %v1188
        %v1190 = vrot.slane %v1187, 4
        %v1191 = vsel %vm1164, 0, %v1190
        %v1192 = vrot.slane %v1141, 4
        %v1193 = vsel %vm1164, %v1192, %v1133
        %v1195 = vunpack.c.l.s4 1983009808
        %v1196 = vunpack.c.0.s8 %v1195
        %v1197 = vperm.slane %v1193, %v1196
        %v1198 = vrot.slane %v1145, 4
        %v1199 = vsel %vm1164, %v1198, %v1137
        %v1201 = vunpack.c.l.s4 1983009808
        %v1202 = vunpack.c.0.s8 %v1201
        %v1203 = vperm.slane %v1199, %v1202
        %v1204 = vrot.slane %v1203, 4
        %v1205 = vsel %vm1164, %v1204, %v1197
        %v1206 = vrot.slane %v1197, 4
        %v1207 = vsel %vm1164, %v1203, %v1206
        %v1209 = vunpack.c.l.s4 1934713408
        %v1210 = vunpack.c.0.s8 %v1209
        %v1211 = vperm.slane %v1205, %v1210
        %v1213 = vunpack.c.l.s4 1934713408
        %v1214 = vunpack.c.0.s8 %v1213
        %v1215 = vperm.slane %v1207, %v1214
        %v1216 = vrot.slane %v1211, 4
        %v1217 = vsel %vm1164, 0, %v1216
        %v1218 = vrot.slane %v1215, 4
        %v1219 = vsel %vm1164, 0, %v1218
        %v1220 = vrot.slane %v1155, 4
        %v1221 = vsel %vm1164, %v1220, %v1147
        %v1223 = vunpack.c.l.s4 1983009808
        %v1224 = vunpack.c.0.s8 %v1223
        %v1225 = vperm.slane %v1221, %v1224
        %v1226 = vrot.slane %v1159, 4
        %v1227 = vsel %vm1164, %v1226, %v1151
        %v1229 = vunpack.c.l.s4 1983009808
        %v1230 = vunpack.c.0.s8 %v1229
        %v1231 = vperm.slane %v1227, %v1230
        %v1232 = vrot.slane %v1231, 4
        %v1233 = vsel %vm1164, %v1232, %v1225
        %v1234 = vrot.slane %v1225, 4
        %v1235 = vsel %vm1164, %v1231, %v1234
        %v1237 = vunpack.c.l.s4 1934713408
        %v1238 = vunpack.c.0.s8 %v1237
        %v1239 = vperm.slane %v1233, %v1238
        %v1241 = vunpack.c.l.s4 1934713408
        %v1242 = vunpack.c.0.s8 %v1241
        %v1243 = vperm.slane %v1235, %v1242
        %v1244 = vrot.slane %v1239, 4
        %v1245 = vsel %vm1164, 0, %v1244
        %v1246 = vrot.slane %v1243, 4
        %v1247 = vsel %vm1164, 0, %v1246
        %v1248 = vrot.slane %v1157, 4
        %v1249 = vsel %vm1164, %v1248, %v1149
        %v1251 = vunpack.c.l.s4 1983009808
        %v1252 = vunpack.c.0.s8 %v1251
        %v1253 = vperm.slane %v1249, %v1252
        %v1254 = vrot.slane %v1161, 4
        %v1255 = vsel %vm1164, %v1254, %v1153
        %v1257 = vunpack.c.l.s4 1983009808
        %v1258 = vunpack.c.0.s8 %v1257
        %v1259 = vperm.slane %v1255, %v1258
        %v1260 = vrot.slane %v1259, 4
        %v1261 = vsel %vm1164, %v1260, %v1253
        %v1262 = vrot.slane %v1253, 4
        %v1263 = vsel %vm1164, %v1259, %v1262
        %v1265 = vunpack.c.l.s4 1934713408
        %v1266 = vunpack.c.0.s8 %v1265
        %v1267 = vperm.slane %v1261, %v1266
        %v1269 = vunpack.c.l.s4 1934713408
        %v1270 = vunpack.c.0.s8 %v1269
        %v1271 = vperm.slane %v1263, %v1270
        %v1272 = vrot.slane %v1267, 4
        %v1273 = vsel %vm1164, 0, %v1272
        %v1274 = vrot.slane %v1271, 4
        %v1275 = vsel %vm1164, 0, %v1274
        %v1276 = vrot.slane %v1140, 4
        %v1277 = vsel %vm1164, %v1276, %v1132
        %v1279 = vunpack.c.l.s4 1983009808
        %v1280 = vunpack.c.0.s8 %v1279
        %v1281 = vperm.slane %v1277, %v1280
        %v1282 = vrot.slane %v1144, 4
        %v1283 = vsel %vm1164, %v1282, %v1136
        %v1285 = vunpack.c.l.s4 1983009808
        %v1286 = vunpack.c.0.s8 %v1285
        %v1287 = vperm.slane %v1283, %v1286
        %v1288 = vrot.slane %v1287, 4
        %v1289 = vsel %vm1164, %v1288, %v1281
        %v1291 = vunpack.c.l.s4 1934713408
        %v1292 = vunpack.c.0.s8 %v1291
        %v1293 = vperm.slane %v1289, %v1292
        %v1294 = vrot.slane %v1293, 4
        %v1295 = vsel %vm1164, 0, %v1294
        %v1296 = vrot.slane %v1142, 4
        %v1297 = vsel %vm1164, %v1296, %v1134
        %v1299 = vunpack.c.l.s4 1983009808
        %v1300 = vunpack.c.0.s8 %v1299
        %v1301 = vperm.slane %v1297, %v1300
        %v1302 = vrot.slane %v1146, 4
        %v1303 = vsel %vm1164, %v1302, %v1138
        %v1305 = vunpack.c.l.s4 1983009808
        %v1306 = vunpack.c.0.s8 %v1305
        %v1307 = vperm.slane %v1303, %v1306
        %v1308 = vrot.slane %v1307, 4
        %v1309 = vsel %vm1164, %v1308, %v1301
        %v1311 = vunpack.c.l.s4 1934713408
        %v1312 = vunpack.c.0.s8 %v1311
        %v1313 = vperm.slane %v1309, %v1312
        %v1314 = vrot.slane %v1313, 4
        %v1315 = vsel %vm1164, 0, %v1314
        %v1316 = vrot.slane %v1156, 4
        %v1317 = vsel %vm1164, %v1316, %v1148
        %v1319 = vunpack.c.l.s4 1983009808
        %v1320 = vunpack.c.0.s8 %v1319
        %v1321 = vperm.slane %v1317, %v1320
        %v1322 = vrot.slane %v1160, 4
        %v1323 = vsel %vm1164, %v1322, %v1152
        %v1325 = vunpack.c.l.s4 1983009808
        %v1326 = vunpack.c.0.s8 %v1325
        %v1327 = vperm.slane %v1323, %v1326
        %v1328 = vrot.slane %v1327, 4
        %v1329 = vsel %vm1164, %v1328, %v1321
        %v1331 = vunpack.c.l.s4 1934713408
        %v1332 = vunpack.c.0.s8 %v1331
        %v1333 = vperm.slane %v1329, %v1332
        %v1334 = vrot.slane %v1333, 4
        %v1335 = vsel %vm1164, 0, %v1334
        %v1336 = vrot.slane %v1158, 4
        %v1337 = vsel %vm1164, %v1336, %v1150
        %v1339 = vunpack.c.l.s4 1983009808
        %v1340 = vunpack.c.0.s8 %v1339
        %v1341 = vperm.slane %v1337, %v1340
        %v1342 = vrot.slane %v1162, 4
        %v1343 = vsel %vm1164, %v1342, %v1154
        %v1345 = vunpack.c.l.s4 1983009808
        %v1346 = vunpack.c.0.s8 %v1345
        %v1347 = vperm.slane %v1343, %v1346
        %v1348 = vrot.slane %v1347, 4
        %v1349 = vsel %vm1164, %v1348, %v1341
        %v1351 = vunpack.c.l.s4 1934713408
        %v1352 = vunpack.c.0.s8 %v1351
        %v1353 = vperm.slane %v1349, %v1352
        %v1354 = vrot.slane %v1353, 4
        %v1355 = vsel %vm1164, 0, %v1354
        %v1358 = vpack.i.b16 %v1211, %v1183
        %v1359 = vshrl.u32 %v1183, 16
        %v1360 = vshrl.u32 %v1211, 16
        %v1361 = vpack.i.b16 %v1360, %v1359
        %v1364 = vpack.i.b16 %v1217, %v1189
        %v1365 = vshrl.u32 %v1189, 16
        %v1366 = vshrl.u32 %v1217, 16
        %v1367 = vpack.i.b16 %v1366, %v1365
        %v1370 = vpack.i.b16 %v1215, %v1187
        %v1371 = vshrl.u32 %v1187, 16
        %v1372 = vshrl.u32 %v1215, 16
        %v1373 = vpack.i.b16 %v1372, %v1371
        %v1376 = vpack.i.b16 %v1219, %v1191
        %v1377 = vshrl.u32 %v1191, 16
        %v1378 = vshrl.u32 %v1219, 16
        %v1379 = vpack.i.b16 %v1378, %v1377
        %v1382 = vpack.i.b16 %v1313, %v1293
        %v1383 = vshrl.u32 %v1293, 16
        %v1384 = vshrl.u32 %v1313, 16
        %v1385 = vpack.i.b16 %v1384, %v1383
        %v1388 = vpack.i.b16 %v1315, %v1295
        %v1389 = vshrl.u32 %v1295, 16
        %v1390 = vshrl.u32 %v1315, 16
        %v1391 = vpack.i.b16 %v1390, %v1389
        %v1394 = vpack.i.b16 %v1267, %v1239
        %v1395 = vshrl.u32 %v1239, 16
        %v1396 = vshrl.u32 %v1267, 16
        %v1397 = vpack.i.b16 %v1396, %v1395
        %v1400 = vpack.i.b16 %v1273, %v1245
        %v1401 = vshrl.u32 %v1245, 16
        %v1402 = vshrl.u32 %v1273, 16
        %v1403 = vpack.i.b16 %v1402, %v1401
        %v1406 = vpack.i.b16 %v1271, %v1243
        %v1407 = vshrl.u32 %v1243, 16
        %v1408 = vshrl.u32 %v1271, 16
        %v1409 = vpack.i.b16 %v1408, %v1407
        %v1412 = vpack.i.b16 %v1275, %v1247
        %v1413 = vshrl.u32 %v1247, 16
        %v1414 = vshrl.u32 %v1275, 16
        %v1415 = vpack.i.b16 %v1414, %v1413
        %v1418 = vpack.i.b16 %v1353, %v1333
        %v1419 = vshrl.u32 %v1333, 16
        %v1420 = vshrl.u32 %v1353, 16
        %v1421 = vpack.i.b16 %v1420, %v1419
        %v1424 = vpack.i.b16 %v1355, %v1335
        %v1425 = vshrl.u32 %v1335, 16
        %v1426 = vshrl.u32 %v1355, 16
        %v1427 = vpack.i.b16 %v1426, %v1425
        %vm1428 = vcmask 130048
        %v1430 = vsel %vm1428, %v1358, 0
        %v1433 = vsel %vm1428, %v1370, 0
        %1435 = vmatpush.bf16.xpose.msra.mxu0 0
        %1436 = vmatpush.bf16.xpose.msra.mxu0 0
        %1437 = vmatpush.bf16.xpose.msra.mxu0 0
        %1438 = vmatpush.bf16.xpose.msra.mxu0 0
        %1439 = vmatpush.bf16.xpose.msra.mxu0 0
        %1440 = vmatpush.bf16.xpose.msra.mxu0 0
        %1441 = vmatpush.bf16.xpose.msra.mxu0 0
        %1442 = vmatpush.bf16.xpose.msra.mxu0 %v1433
        %1443 = vmatmul.bf16.gmra.mxu0 %v1430
        %v1444 = vpop.f32.mrf.mxu0
        %v1445 = vadd.f32 0.0, %v1444
        %v1446 = vpop.f32.mrf.mxu0
        %1447 = vdwg.mxu0
        %v1449 = vsel %vm1428, %v1394, 0
        %v1452 = vsel %vm1428, %v1406, 0
        %1454 = vmatpush.bf16.xpose.msra.mxu0 0
        %1455 = vmatpush.bf16.xpose.msra.mxu0 0
        %1456 = vmatpush.bf16.xpose.msra.mxu0 0
        %1457 = vmatpush.bf16.xpose.msra.mxu0 0
        %1458 = vmatpush.bf16.xpose.msra.mxu0 0
        %1459 = vmatpush.bf16.xpose.msra.mxu0 0
        %1460 = vmatpush.bf16.xpose.msra.mxu0 0
        %1461 = vmatpush.bf16.xpose.msra.mxu0 %v1452
        %1462 = vmatmul.bf16.gmra.mxu0 %v1449
        %v1463 = vpop.f32.mrf.mxu0
        %v1464 = vadd.f32 0.0, %v1463
        %v1465 = vpop.f32.mrf.mxu0
        %1466 = vdwg.mxu0
        %v1468 = vsel %vm1428, %v1361, 0
        %v1471 = vsel %vm1428, %v1373, 0
        %1473 = vmatpush.bf16.xpose.msra.mxu0 0
        %1474 = vmatpush.bf16.xpose.msra.mxu0 0
        %1475 = vmatpush.bf16.xpose.msra.mxu0 0
        %1476 = vmatpush.bf16.xpose.msra.mxu0 0
        %1477 = vmatpush.bf16.xpose.msra.mxu0 0
        %1478 = vmatpush.bf16.xpose.msra.mxu0 0
        %1479 = vmatpush.bf16.xpose.msra.mxu0 0
        %1480 = vmatpush.bf16.xpose.msra.mxu0 %v1471
        %1481 = vmatmul.bf16.gmra.mxu0 %v1468
        %v1482 = vpop.f32.mrf.mxu0
        %v1483 = vadd.f32 0.0, %v1482
        %v1484 = vpop.f32.mrf.mxu0
        %1485 = vdwg.mxu0
        %v1487 = vsel %vm1428, %v1397, 0
        %v1490 = vsel %vm1428, %v1409, 0
        %1492 = vmatpush.bf16.xpose.msra.mxu0 0
        %1493 = vmatpush.bf16.xpose.msra.mxu0 0
        %1494 = vmatpush.bf16.xpose.msra.mxu0 0
        %1495 = vmatpush.bf16.xpose.msra.mxu0 0
        %1496 = vmatpush.bf16.xpose.msra.mxu0 0
        %1497 = vmatpush.bf16.xpose.msra.mxu0 0
        %1498 = vmatpush.bf16.xpose.msra.mxu0 0
        %1499 = vmatpush.bf16.xpose.msra.mxu0 %v1490
        %1500 = vmatmul.bf16.gmra.mxu0 %v1487
        %v1501 = vpop.f32.mrf.mxu0
        %v1502 = vadd.f32 0.0, %v1501
        %v1503 = vpop.f32.mrf.mxu0
        %1504 = vdwg.mxu0
        %v1506 = vsel %vm1428, %v1364, 0
        %v1509 = vsel %vm1428, %v1376, 0
        %1511 = vmatpush.bf16.xpose.msra.mxu0 0
        %1512 = vmatpush.bf16.xpose.msra.mxu0 0
        %1513 = vmatpush.bf16.xpose.msra.mxu0 0
        %1514 = vmatpush.bf16.xpose.msra.mxu0 0
        %1515 = vmatpush.bf16.xpose.msra.mxu0 0
        %1516 = vmatpush.bf16.xpose.msra.mxu0 0
        %1517 = vmatpush.bf16.xpose.msra.mxu0 0
        %1518 = vmatpush.bf16.xpose.msra.mxu0 %v1509
        %1519 = vmatmul.bf16.gmra.mxu0 %v1506
        %v1520 = vpop.f32.mrf.mxu0
        %v1521 = vadd.f32 0.0, %v1520
        %v1522 = vpop.f32.mrf.mxu0
        %1523 = vdwg.mxu0
        %v1525 = vsel %vm1428, %v1400, 0
        %v1528 = vsel %vm1428, %v1412, 0
        %1530 = vmatpush.bf16.xpose.msra.mxu0 0
        %1531 = vmatpush.bf16.xpose.msra.mxu0 0
        %1532 = vmatpush.bf16.xpose.msra.mxu0 0
        %1533 = vmatpush.bf16.xpose.msra.mxu0 0
        %1534 = vmatpush.bf16.xpose.msra.mxu0 0
        %1535 = vmatpush.bf16.xpose.msra.mxu0 0
        %1536 = vmatpush.bf16.xpose.msra.mxu0 0
        %1537 = vmatpush.bf16.xpose.msra.mxu0 %v1528
        %1538 = vmatmul.bf16.gmra.mxu0 %v1525
        %v1539 = vpop.f32.mrf.mxu0
        %v1540 = vadd.f32 0.0, %v1539
        %v1541 = vpop.f32.mrf.mxu0
        %1542 = vdwg.mxu0
        %v1544 = vsel %vm1428, %v1367, 0
        %v1547 = vsel %vm1428, %v1379, 0
        %1549 = vmatpush.bf16.xpose.msra.mxu0 0
        %1550 = vmatpush.bf16.xpose.msra.mxu0 0
        %1551 = vmatpush.bf16.xpose.msra.mxu0 0
        %1552 = vmatpush.bf16.xpose.msra.mxu0 0
        %1553 = vmatpush.bf16.xpose.msra.mxu0 0
        %1554 = vmatpush.bf16.xpose.msra.mxu0 0
        %1555 = vmatpush.bf16.xpose.msra.mxu0 0
        %1556 = vmatpush.bf16.xpose.msra.mxu0 %v1547
        %1557 = vmatmul.bf16.gmra.mxu0 %v1544
        %v1558 = vpop.f32.mrf.mxu0
        %v1559 = vadd.f32 0.0, %v1558
        %v1560 = vpop.f32.mrf.mxu0
        %1561 = vdwg.mxu0
        %v1563 = vsel %vm1428, %v1403, 0
        %v1566 = vsel %vm1428, %v1415, 0
        %1568 = vmatpush.bf16.xpose.msra.mxu0 0
        %1569 = vmatpush.bf16.xpose.msra.mxu0 0
        %1570 = vmatpush.bf16.xpose.msra.mxu0 0
        %1571 = vmatpush.bf16.xpose.msra.mxu0 0
        %1572 = vmatpush.bf16.xpose.msra.mxu0 0
        %1573 = vmatpush.bf16.xpose.msra.mxu0 0
        %1574 = vmatpush.bf16.xpose.msra.mxu0 0
        %1575 = vmatpush.bf16.xpose.msra.mxu0 %v1566
        %1576 = vmatmul.bf16.gmra.mxu0 %v1563
        %v1577 = vpop.f32.mrf.mxu0
        %v1578 = vadd.f32 0.0, %v1577
        %v1579 = vpop.f32.mrf.mxu0
        %1580 = vdwg.mxu0
        %v1581 = vmul.f32 %v1445, 0.25
        %v1582 = vmul.f32 %v1464, 0.25
        %v1583 = vmul.f32 %v1483, 0.25
        %v1584 = vmul.f32 %v1502, 0.25
        %v1585 = vmul.f32 %v1521, 0.25
        %v1586 = vmul.f32 %v1540, 0.25
        %v1587 = vmul.f32 %v1559, 0.25
        %v1588 = vmul.f32 %v1578, 0.25
        %vm1589 = vcmask 64512
        %v1590 = vsel %vm1589, %v1581, -inf
        %1591 = vmax.xlane.f32.xlu0 %v1590
        %v1592 = vpop.xlane.xlu0 %1591
        %v1593 = vsel %vm1589, %v1582, -inf
        %1594 = vmax.xlane.f32.xlu0 %v1593
        %v1595 = vpop.xlane.xlu0 %1594
        %v1596 = vsel %vm1589, %v1583, -inf
        %1597 = vmax.xlane.f32.xlu0 %v1596
        %v1598 = vpop.xlane.xlu0 %1597
        %v1599 = vsel %vm1589, %v1584, -inf
        %1600 = vmax.xlane.f32.xlu0 %v1599
        %v1601 = vpop.xlane.xlu0 %1600
        %v1602 = vsel %vm1589, %v1585, -inf
        %1603 = vmax.xlane.f32.xlu0 %v1602
        %v1604 = vpop.xlane.xlu0 %1603
        %v1605 = vsel %vm1589, %v1586, -inf
        %1606 = vmax.xlane.f32.xlu0 %v1605
        %v1607 = vpop.xlane.xlu0 %1606
        %v1608 = vsel %vm1589, %v1587, -inf
        %1609 = vmax.xlane.f32.xlu0 %v1608
        %v1610 = vpop.xlane.xlu0 %1609
        %v1611 = vsel %vm1589, %v1588, -inf
        %1612 = vmax.xlane.f32.xlu0 %v1611
        %v1613 = vpop.xlane.xlu0 %1612
        %v1614 = vsub.f32 %v1581, %v1592
        %v1615 = vsub.f32 %v1582, %v1595
        %v1616 = vsub.f32 %v1583, %v1598
        %v1617 = vsub.f32 %v1584, %v1601
        %v1618 = vsub.f32 %v1585, %v1604
        %v1619 = vsub.f32 %v1586, %v1607
        %v1620 = vsub.f32 %v1587, %v1610
        %v1621 = vsub.f32 %v1588, %v1613
        %v1622 = vmul.f32 %v1614, 1.442695
        %v1623 = vpow.pop %v1622
        %v1624 = vmul.f32 %v1615, 1.442695
        %v1625 = vpow.pop %v1624
        %v1626 = vmul.f32 %v1616, 1.442695
        %v1627 = vpow.pop %v1626
        %v1628 = vmul.f32 %v1617, 1.442695
        %v1629 = vpow.pop %v1628
        %v1630 = vmul.f32 %v1618, 1.442695
        %v1631 = vpow.pop %v1630
        %v1632 = vmul.f32 %v1619, 1.442695
        %v1633 = vpow.pop %v1632
        %v1634 = vmul.f32 %v1620, 1.442695
        %v1635 = vpow.pop %v1634
        %v1636 = vmul.f32 %v1621, 1.442695
        %v1637 = vpow.pop %v1636
        %v1638 = vsel %vm1589, %v1623, 0.0
        %1639 = vadd.xlane.f32.xlu0 %v1638
        %v1640 = vpop.xlane.xlu0 %1639
        %v1641 = vsel %vm1589, %v1625, 0.0
        %1642 = vadd.xlane.f32.xlu0 %v1641
        %v1643 = vpop.xlane.xlu0 %1642
        %v1644 = vsel %vm1589, %v1627, 0.0
        %1645 = vadd.xlane.f32.xlu0 %v1644
        %v1646 = vpop.xlane.xlu0 %1645
        %v1647 = vsel %vm1589, %v1629, 0.0
        %1648 = vadd.xlane.f32.xlu0 %v1647
        %v1649 = vpop.xlane.xlu0 %1648
        %v1650 = vsel %vm1589, %v1631, 0.0
        %1651 = vadd.xlane.f32.xlu0 %v1650
        %v1652 = vpop.xlane.xlu0 %1651
        %v1653 = vsel %vm1589, %v1633, 0.0
        %1654 = vadd.xlane.f32.xlu0 %v1653
        %v1655 = vpop.xlane.xlu0 %1654
        %v1656 = vsel %vm1589, %v1635, 0.0
        %1657 = vadd.xlane.f32.xlu0 %v1656
        %v1658 = vpop.xlane.xlu0 %1657
        %v1659 = vsel %vm1589, %v1637, 0.0
        %1660 = vadd.xlane.f32.xlu0 %v1659
        %v1661 = vpop.xlane.xlu0 %1660
        %v1662 = vrcp.pop %v1640
        %v1663 = vrcp.pop %v1643
        %v1664 = vrcp.pop %v1646
        %v1665 = vrcp.pop %v1649
        %v1666 = vrcp.pop %v1652
        %v1667 = vrcp.pop %v1655
        %v1668 = vrcp.pop %v1658
        %v1669 = vrcp.pop %v1661
        %v1670 = vmul.f32 %v1623, %v1662
        %v1671 = vmul.f32 %v1625, %v1663
        %v1672 = vmul.f32 %v1627, %v1664
        %v1673 = vmul.f32 %v1629, %v1665
        %v1674 = vmul.f32 %v1631, %v1666
        %v1675 = vmul.f32 %v1633, %v1667
        %v1676 = vmul.f32 %v1635, %v1668
        %v1677 = vmul.f32 %v1637, %v1669
        %v1678 = vpack.c.bf16 %v1670, %v1670
        %v1679 = vpack.c.bf16 %v1671, %v1671
        %v1680 = vpack.c.bf16 %v1672, %v1672
        %v1681 = vpack.c.bf16 %v1673, %v1673
        %v1682 = vpack.c.bf16 %v1674, %v1674
        %v1683 = vpack.c.bf16 %v1675, %v1675
        %v1684 = vpack.c.bf16 %v1676, %v1676
        %v1685 = vpack.c.bf16 %v1677, %v1677
        %v1687 = vsel %vm1589, %v1678, 0
        %vm1689 = vcmask 1043456
        %v1691 = vsel %vm1689, %v1382, 0
        %1693 = vmatpush.bf16.msra.mxu0 0
        %1694 = vmatpush.bf16.msra.mxu0 0
        %1695 = vmatpush.bf16.msra.mxu0 0
        %1696 = vmatpush.bf16.msra.mxu0 0
        %1697 = vmatpush.bf16.msra.mxu0 0
        %1698 = vmatpush.bf16.msra.mxu0 0
        %1699 = vmatpush.bf16.msra.mxu0 0
        %1700 = vmatpush.bf16.msra.mxu0 %v1691
        %1701 = vmatmul.bf16.gmra.mxu0 %v1687
        %v1702 = vpop.f32.mrf.mxu0
        %v1703 = vadd.f32 0.0, %v1702
        %v1704 = vpop.f32.mrf.mxu0
        %1705 = vdwg.mxu0
        %v1707 = vsel %vm1589, %v1679, 0
        %v1710 = vsel %vm1689, %v1418, 0
        %1712 = vmatpush.bf16.msra.mxu0 0
        %1713 = vmatpush.bf16.msra.mxu0 0
        %1714 = vmatpush.bf16.msra.mxu0 0
        %1715 = vmatpush.bf16.msra.mxu0 0
        %1716 = vmatpush.bf16.msra.mxu0 0
        %1717 = vmatpush.bf16.msra.mxu0 0
        %1718 = vmatpush.bf16.msra.mxu0 0
        %1719 = vmatpush.bf16.msra.mxu0 %v1710
        %1720 = vmatmul.bf16.gmra.mxu0 %v1707
        %v1721 = vpop.f32.mrf.mxu0
        %v1722 = vadd.f32 0.0, %v1721
        %v1723 = vpop.f32.mrf.mxu0
        %1724 = vdwg.mxu0
        %v1726 = vsel %vm1589, %v1680, 0
        %v1729 = vsel %vm1689, %v1385, 0
        %1731 = vmatpush.bf16.msra.mxu0 0
        %1732 = vmatpush.bf16.msra.mxu0 0
        %1733 = vmatpush.bf16.msra.mxu0 0
        %1734 = vmatpush.bf16.msra.mxu0 0
        %1735 = vmatpush.bf16.msra.mxu0 0
        %1736 = vmatpush.bf16.msra.mxu0 0
        %1737 = vmatpush.bf16.msra.mxu0 0
        %1738 = vmatpush.bf16.msra.mxu0 %v1729
        %1739 = vmatmul.bf16.gmra.mxu0 %v1726
        %v1740 = vpop.f32.mrf.mxu0
        %v1741 = vadd.f32 0.0, %v1740
        %v1742 = vpop.f32.mrf.mxu0
        %1743 = vdwg.mxu0
        %v1745 = vsel %vm1589, %v1681, 0
        %v1748 = vsel %vm1689, %v1421, 0
        %1750 = vmatpush.bf16.msra.mxu0 0
        %1751 = vmatpush.bf16.msra.mxu0 0
        %1752 = vmatpush.bf16.msra.mxu0 0
        %1753 = vmatpush.bf16.msra.mxu0 0
        %1754 = vmatpush.bf16.msra.mxu0 0
        %1755 = vmatpush.bf16.msra.mxu0 0
        %1756 = vmatpush.bf16.msra.mxu0 0
        %1757 = vmatpush.bf16.msra.mxu0 %v1748
        %1758 = vmatmul.bf16.gmra.mxu0 %v1745
        %v1759 = vpop.f32.mrf.mxu0
        %v1760 = vadd.f32 0.0, %v1759
        %v1761 = vpop.f32.mrf.mxu0
        %1762 = vdwg.mxu0
        %v1764 = vsel %vm1589, %v1682, 0
        %v1767 = vsel %vm1689, %v1388, 0
        %1769 = vmatpush.bf16.msra.mxu0 0
        %1770 = vmatpush.bf16.msra.mxu0 0
        %1771 = vmatpush.bf16.msra.mxu0 0
        %1772 = vmatpush.bf16.msra.mxu0 0
        %1773 = vmatpush.bf16.msra.mxu0 0
        %1774 = vmatpush.bf16.msra.mxu0 0
        %1775 = vmatpush.bf16.msra.mxu0 0
        %1776 = vmatpush.bf16.msra.mxu0 %v1767
        %1777 = vmatmul.bf16.gmra.mxu0 %v1764
        %v1778 = vpop.f32.mrf.mxu0
        %v1779 = vadd.f32 0.0, %v1778
        %v1780 = vpop.f32.mrf.mxu0
        %1781 = vdwg.mxu0
        %v1783 = vsel %vm1589, %v1683, 0
        %v1786 = vsel %vm1689, %v1424, 0
        %1788 = vmatpush.bf16.msra.mxu0 0
        %1789 = vmatpush.bf16.msra.mxu0 0
        %1790 = vmatpush.bf16.msra.mxu0 0
        %1791 = vmatpush.bf16.msra.mxu0 0
        %1792 = vmatpush.bf16.msra.mxu0 0
        %1793 = vmatpush.bf16.msra.mxu0 0
        %1794 = vmatpush.bf16.msra.mxu0 0
        %1795 = vmatpush.bf16.msra.mxu0 %v1786
        %1796 = vmatmul.bf16.gmra.mxu0 %v1783
        %v1797 = vpop.f32.mrf.mxu0
        %v1798 = vadd.f32 0.0, %v1797
        %v1799 = vpop.f32.mrf.mxu0
        %1800 = vdwg.mxu0
        %v1802 = vsel %vm1589, %v1684, 0
        %v1805 = vsel %vm1689, %v1391, 0
        %1807 = vmatpush.bf16.msra.mxu0 0
        %1808 = vmatpush.bf16.msra.mxu0 0
        %1809 = vmatpush.bf16.msra.mxu0 0
        %1810 = vmatpush.bf16.msra.mxu0 0
        %1811 = vmatpush.bf16.msra.mxu0 0
        %1812 = vmatpush.bf16.msra.mxu0 0
        %1813 = vmatpush.bf16.msra.mxu0 0
        %1814 = vmatpush.bf16.msra.mxu0 %v1805
        %1815 = vmatmul.bf16.gmra.mxu0 %v1802
        %v1816 = vpop.f32.mrf.mxu0
        %v1817 = vadd.f32 0.0, %v1816
        %v1818 = vpop.f32.mrf.mxu0
        %1819 = vdwg.mxu0
        %v1821 = vsel %vm1589, %v1685, 0
        %v1824 = vsel %vm1689, %v1427, 0
        %1826 = vmatpush.bf16.msra.mxu0 0
        %1827 = vmatpush.bf16.msra.mxu0 0
        %1828 = vmatpush.bf16.msra.mxu0 0
        %1829 = vmatpush.bf16.msra.mxu0 0
        %1830 = vmatpush.bf16.msra.mxu0 0
        %1831 = vmatpush.bf16.msra.mxu0 0
        %1832 = vmatpush.bf16.msra.mxu0 0
        %1833 = vmatpush.bf16.msra.mxu0 %v1824
        %1834 = vmatmul.bf16.gmra.mxu0 %v1821
        %v1835 = vpop.f32.mrf.mxu0
        %v1836 = vadd.f32 0.0, %v1835
        %v1837 = vpop.f32.mrf.mxu0
        %1838 = vdwg.mxu0
        %v1839 = vpack.c.bf16 %v1703, %v1703
        %v1840 = vpack.c.bf16 %v1722, %v1722
        %v1841 = vpack.c.bf16 %v1741, %v1741
        %v1842 = vpack.c.bf16 %v1760, %v1760
        %v1843 = vpack.c.bf16 %v1779, %v1779
        %v1844 = vpack.c.bf16 %v1798, %v1798
        %v1845 = vpack.c.bf16 %v1817, %v1817
        %v1846 = vpack.c.bf16 %v1836, %v1836
        %v1847 = vld [vmem:[%s571] sm:$0xf]
        %v1848 = vld [vmem:[%s571 + $0x4] sm:$0xf]
        %v1849 = vld [vmem:[%s571 + $0x8] sm:$0xf]
        %v1850 = vld [vmem:[%s571 + $0xc] sm:$0xf]
        %v1851 = vld [vmem:[%s571 + $0x10] sm:$0xf]
        %v1852 = vld [vmem:[%s571 + $0x14] sm:$0xf]
        %v1853 = vld [vmem:[%s571 + $0x18] sm:$0xf]
        %v1854 = vld [vmem:[%s571 + $0x1c] sm:$0xf]
        %v1857 = vunpack.c.l.b16 %v1839
        %v1858 = vunpack.c.l.b16 %v1840
        %v1859 = vpack.c.b16 %v1858, %v1857
        %v1862 = vunpack.c.l.b16 %v1847
        %v1863 = vunpack.c.l.b16 %v1848
        %v1864 = vpack.c.b16 %v1863, %v1862
        %v1867 = vsel %vm1428, %v1859, 0
        %1869 = vmatpush.bf16.msra.mxu0 0
        %1870 = vmatpush.bf16.msra.mxu0 0
        %1871 = vmatpush.bf16.msra.mxu0 0
        %1872 = vmatpush.bf16.msra.mxu0 0
        %1873 = vmatpush.bf16.msra.mxu0 0
        %1874 = vmatpush.bf16.msra.mxu0 0
        %1875 = vmatpush.bf16.msra.mxu0 0
        %1876 = vmatpush.bf16.msra.mxu0 %v1864
        %1877 = vmatmul.bf16.gmra.mxu0 %v1867
        %v1878 = vpop.f32.mrf.mxu0
        %v1879 = vadd.f32 0.0, %v1878
        %v1880 = vpop.f32.mrf.mxu0
        %v1881 = vadd.f32 0.0, %v1880
        %1882 = vdwg.mxu0
        %v1885 = vunpack.c.l.b16 %v1841
        %v1886 = vunpack.c.l.b16 %v1842
        %v1887 = vpack.c.b16 %v1886, %v1885
        %v1890 = vunpack.c.l.b16 %v1849
        %v1891 = vunpack.c.l.b16 %v1850
        %v1892 = vpack.c.b16 %v1891, %v1890
        %v1895 = vsel %vm1428, %v1887, 0
        %1897 = vmatpush.bf16.msra.mxu0 0
        %1898 = vmatpush.bf16.msra.mxu0 0
        %1899 = vmatpush.bf16.msra.mxu0 0
        %1900 = vmatpush.bf16.msra.mxu0 0
        %1901 = vmatpush.bf16.msra.mxu0 0
        %1902 = vmatpush.bf16.msra.mxu0 0
        %1903 = vmatpush.bf16.msra.mxu0 0
        %1904 = vmatpush.bf16.msra.mxu0 %v1892
        %1905 = vmatmul.bf16.gmra.mxu0 %v1895
        %v1906 = vpop.f32.mrf.mxu0
        %v1907 = vadd.f32 0.0, %v1906
        %v1908 = vpop.f32.mrf.mxu0
        %v1909 = vadd.f32 0.0, %v1908
        %1910 = vdwg.mxu0
        %v1913 = vunpack.c.l.b16 %v1843
        %v1914 = vunpack.c.l.b16 %v1844
        %v1915 = vpack.c.b16 %v1914, %v1913
        %v1918 = vunpack.c.l.b16 %v1851
        %v1919 = vunpack.c.l.b16 %v1852
        %v1920 = vpack.c.b16 %v1919, %v1918
        %v1923 = vsel %vm1428, %v1915, 0
        %1925 = vmatpush.bf16.msra.mxu0 0
        %1926 = vmatpush.bf16.msra.mxu0 0
        %1927 = vmatpush.bf16.msra.mxu0 0
        %1928 = vmatpush.bf16.msra.mxu0 0
        %1929 = vmatpush.bf16.msra.mxu0 0
        %1930 = vmatpush.bf16.msra.mxu0 0
        %1931 = vmatpush.bf16.msra.mxu0 0
        %1932 = vmatpush.bf16.msra.mxu0 %v1920
        %1933 = vmatmul.bf16.gmra.mxu0 %v1923
        %v1934 = vpop.f32.mrf.mxu0
        %v1935 = vadd.f32 0.0, %v1934
        %v1936 = vpop.f32.mrf.mxu0
        %v1937 = vadd.f32 0.0, %v1936
        %1938 = vdwg.mxu0
        %v1941 = vunpack.c.l.b16 %v1845
        %v1942 = vunpack.c.l.b16 %v1846
        %v1943 = vpack.c.b16 %v1942, %v1941
        %v1946 = vunpack.c.l.b16 %v1853
        %v1947 = vunpack.c.l.b16 %v1854
        %v1948 = vpack.c.b16 %v1947, %v1946
        %v1951 = vsel %vm1428, %v1943, 0
        %1953 = vmatpush.bf16.msra.mxu0 0
        %1954 = vmatpush.bf16.msra.mxu0 0
        %1955 = vmatpush.bf16.msra.mxu0 0
        %1956 = vmatpush.bf16.msra.mxu0 0
        %1957 = vmatpush.bf16.msra.mxu0 0
        %1958 = vmatpush.bf16.msra.mxu0 0
        %1959 = vmatpush.bf16.msra.mxu0 0
        %1960 = vmatpush.bf16.msra.mxu0 %v1948
        %1961 = vmatmul.bf16.gmra.mxu0 %v1951
        %v1962 = vpop.f32.mrf.mxu0
        %v1963 = vadd.f32 0.0, %v1962
        %v1964 = vpop.f32.mrf.mxu0
        %v1965 = vadd.f32 0.0, %v1964
        %1966 = vdwg.mxu0
        %v1967 = vsel %vm612, %v1879, 0.0
        %v1968 = vsel %vm612, %v1907, 0.0
        %v1969 = vadd.f32 %v1967, %v1968
        %v1970 = vsel %vm612, %v1935, 0.0
        %v1971 = vadd.f32 %v1969, %v1970
        %v1972 = vsel %vm612, %v1963, 0.0
        %v1973 = vadd.f32 %v1971, %v1972
        %v1974 = vsel %vm612, %v1881, 0.0
        %v1975 = vsel %vm612, %v1909, 0.0
        %v1976 = vadd.f32 %v1974, %v1975
        %v1977 = vsel %vm612, %v1937, 0.0
        %v1978 = vadd.f32 %v1976, %v1977
        %v1979 = vsel %vm612, %v1965, 0.0
        %v1980 = vadd.f32 %v1978, %v1979
        %v1981 = vld [vmem:[%s574] sm:$0x1]
        %v1983 = vperm.slane %v1981, 0
        %v1985 = vadd.f32 %v1973, %v1983
        %v1986 = vadd.f32 %v1980, %v1983
        %v1987 = vadd.f32 %v608, %v1985
        %v1988 = vadd.f32 %v609, %v1986
        %v1989 = vld [vmem:[%s577] sm:$0x1]
        %v1990 = vld [vmem:[%s580] sm:$0x1]
        %v1991 = vsel %vm612, %v1987, 0.0
        %1992 = vadd.xlane.f32.xlu0 %v1991
        %v1993 = vpop.xlane.xlu0 %1992
        %v1994 = vsel %vm612, %v1988, 0.0
        %1995 = vadd.xlane.f32.xlu0 %v1994
        %v1996 = vpop.xlane.xlu0 %1995
        %v1997 = vmul.f32 %v1993, %v625
        %v1998 = vmul.f32 %v1996, %v625
        %v1999 = vsub.f32 %v1987, %v1997
        %v2000 = vsub.f32 %v1988, %v1998
        %v2001 = vmul.f32 %v1999, %v1999
        %v2002 = vmul.f32 %v2000, %v2000
        %v2003 = vsel %vm612, %v2001, 0.0
        %2004 = vadd.xlane.f32.xlu0 %v2003
        %v2005 = vpop.xlane.xlu0 %2004
        %v2006 = vsel %vm612, %v2002, 0.0
        %2007 = vadd.xlane.f32.xlu0 %v2006
        %v2008 = vpop.xlane.xlu0 %2007
        %v2009 = vmul.f32 %v2005, %v625
        %v2010 = vmul.f32 %v2008, %v625
        %v2011 = vadd.f32 %v2009, 1e-05
        %v2012 = vadd.f32 %v2010, 1e-05
        %v2013 = vrsqrt.pop %v2011
        %v2014 = vmul.f32 %v2013, %v2011
        %v2015 = vmul.f32 %v2014, %v2013
        %v2016 = vmul.f32 0.5, %v2015
        %v2017 = vsub.f32 1.5, %v2016
        %v2018 = vmul.f32 %v2013, %v2017
        %vm2019 = vweird.f32 %v2011
        %vm2020 = vweird.f32 %v2013
        %vm2021 = vmor %vm2019, %vm2020
        %v2022 = vsel %vm2021, %v2013, %v2018
        %v2023 = vrsqrt.pop %v2012
        %v2024 = vmul.f32 %v2023, %v2012
        %v2025 = vmul.f32 %v2024, %v2023
        %v2026 = vmul.f32 0.5, %v2025
        %v2027 = vsub.f32 1.5, %v2026
        %v2028 = vmul.f32 %v2023, %v2027
        %vm2029 = vweird.f32 %v2012
        %vm2030 = vweird.f32 %v2023
        %vm2031 = vmor %vm2029, %vm2030
        %v2032 = vsel %vm2031, %v2023, %v2028
        %v2033 = vmul.f32 %v1999, %v2022
        %v2034 = vmul.f32 %v2000, %v2032
        %v2036 = vperm.slane %v1989, 0
        %v2038 = vmul.f32 %v2033, %v2036
        %v2039 = vmul.f32 %v2034, %v2036
        %v2041 = vperm.slane %v1990, 0
        %v2043 = vadd.f32 %v2038, %v2041
        %v2044 = vadd.f32 %v2039, %v2041
        %v2045 = vpack.c.bf16 %v2044, %v2043
        %v2046 = vld [vmem:[%s585] sm:$0xf]
        %v2047 = vld [vmem:[%s585 + $0x4] sm:$0xf]
        %v2048 = vld [vmem:[%s585 + $0x8] sm:$0xf]
        %v2049 = vld [vmem:[%s585 + $0xc] sm:$0xf]
        %v2050 = vld [vmem:[%s588] sm:$0x1]
        %v2052 = vperm.slane %v2050, 0
        %v2058 = vunpack.c.l.b16 %v2046
        %v2059 = vunpack.c.l.b16 %v2047
        %v2060 = vunpack.c.l.b16 %v2048
        %v2061 = vunpack.c.l.b16 %v2049
        %v2062 = vpack.c.b16 %v2059, %v2058
        %v2063 = vpack.c.b16 %v2061, %v2060
        %v2067 = vsel %vm612, %v2045, 0
        %2069 = vmatpush.bf16.msra.mxu0 0
        %2070 = vmatpush.bf16.msra.mxu0 0
        %2071 = vmatpush.bf16.msra.mxu0 0
        %2072 = vmatpush.bf16.msra.mxu0 0
        %2073 = vmatpush.bf16.msra.mxu0 0
        %2074 = vmatpush.bf16.msra.mxu0 0
        %2075 = vmatpush.bf16.msra.mxu0 %v2063
        %2076 = vmatpush.bf16.msra.mxu0 %v2062
        %2077 = vmatmul.bf16.gmra.mxu0 %v2067
        %v2078 = vpop.f32.mrf.mxu0
        %v2079 = vadd.f32 %v2052, %v2078
        %v2080 = vpop.f32.mrf.mxu0
        %v2081 = vadd.f32 %v2052, %v2080
        %2082 = vdwg.mxu0
        %v2083 = vmul.f32 %v2079, 0.5
        %v2084 = vmul.f32 %v2081, 0.5
        %v2085 = vmul.f32 %v2079, 0.70710677
        %v2086 = vmul.f32 %v2081, 0.70710677
        %v2087 = vmul.f32 %v2085, %v2085
        %v2088 = vmin.f32 16.0, %v2087
        %v2089 = vmul.f32 %v2088, 2.1237322e-06
        %v2090 = vadd.f32 %v2089, 0.00028619796
        %v2091 = vmul.f32 %v2088, %v2090
        %v2092 = vadd.f32 %v2091, 0.0036580483
        %v2093 = vmul.f32 %v2088, %v2092
        %v2094 = vadd.f32 %v2093, 0.05243302
        %v2095 = vmul.f32 %v2088, %v2094
        %v2096 = vadd.f32 %v2095, 0.18741608
        %v2097 = vmul.f32 %v2088, %v2096
        %v2098 = vadd.f32 %v2097, 1.1283791
        %v2099 = vmul.f32 %v2085, %v2098
        %v2100 = vmul.f32 %v2088, 3.8918573e-05
        %v2101 = vadd.f32 %v2100, 0.001143296
        %v2102 = vmul.f32 %v2088, %v2101
        %v2103 = vadd.f32 %v2102, 0.014752088
        %v2104 = vmul.f32 %v2088, %v2103
        %v2105 = vadd.f32 %v2104, 0.112945676
        %v2106 = vmul.f32 %v2088, %v2105
        %v2107 = vadd.f32 %v2106, 0.4994258
        %v2108 = vmul.f32 %v2088, %v2107
        %v2109 = vadd.f32 %v2108, 1.0
        %v2110 = vrcp.pop %v2109
        %v2111 = vmul.f32 %v2109, %v2110
        %v2112 = vsub.f32 1.0, %v2111
        %v2113 = vmul.f32 %v2110, %v2112
        %v2114 = vadd.f32 %v2110, %v2113
        %vm2115 = vweird.f32 %v2109
        %vm2116 = vweird.f32 %v2110
        %vm2117 = vmor %vm2115, %vm2116
        %v2118 = vsel %vm2117, %v2110, %v2114
        %v2119 = vand.u32 2147483647, %v2109
        %vm2120 = vcmp.eq.f32.partialorder %v2119, 8.507059e+37
        %v2121 = vand.u32 %v2109, 2147483648
        %v2122 = vor.u32 1.1754944e-38, %v2121
        %v2123 = vsel %vm2120, %v2122, %v2118
        %v2124 = vmul.f32 %v2099, %v2123
        %v2125 = vmin.f32 %v2124, 1.0
        %v2126 = vmax.f32 %v2125, -1.0
        %v2127 = vmul.f32 %v2086, %v2086
        %v2128 = vmin.f32 16.0, %v2127
        %v2129 = vmul.f32 %v2128, 2.1237322e-06
        %v2130 = vadd.f32 %v2129, 0.00028619796
        %v2131 = vmul.f32 %v2128, %v2130
        %v2132 = vadd.f32 %v2131, 0.0036580483
        %v2133 = vmul.f32 %v2128, %v2132
        %v2134 = vadd.f32 %v2133, 0.05243302
        %v2135 = vmul.f32 %v2128, %v2134
        %v2136 = vadd.f32 %v2135, 0.18741608
        %v2137 = vmul.f32 %v2128, %v2136
        %v2138 = vadd.f32 %v2137, 1.1283791
        %v2139 = vmul.f32 %v2086, %v2138
        %v2140 = vmul.f32 %v2128, 3.8918573e-05
        %v2141 = vadd.f32 %v2140, 0.001143296
        %v2142 = vmul.f32 %v2128, %v2141
        %v2143 = vadd.f32 %v2142, 0.014752088
        %v2144 = vmul.f32 %v2128, %v2143
        %v2145 = vadd.f32 %v2144, 0.112945676
        %v2146 = vmul.f32 %v2128, %v2145
        %v2147 = vadd.f32 %v2146, 0.4994258
        %v2148 = vmul.f32 %v2128, %v2147
        %v2149 = vadd.f32 %v2148, 1.0
        %v2150 = vrcp.pop %v2149
        %v2151 = vmul.f32 %v2149, %v2150
        %v2152 = vsub.f32 1.0, %v2151
        %v2153 = vmul.f32 %v2150, %v2152
        %v2154 = vadd.f32 %v2150, %v2153
        %vm2155 = vweird.f32 %v2149
        %vm2156 = vweird.f32 %v2150
        %vm2157 = vmor %vm2155, %vm2156
        %v2158 = vsel %vm2157, %v2150, %v2154
        %v2159 = vand.u32 2147483647, %v2149
        %vm2160 = vcmp.eq.f32.partialorder %v2159, 8.507059e+37
        %v2161 = vand.u32 %v2149, 2147483648
        %v2162 = vor.u32 1.1754944e-38, %v2161
        %v2163 = vsel %vm2160, %v2162, %v2158
        %v2164 = vmul.f32 %v2139, %v2163
        %v2165 = vmin.f32 %v2164, 1.0
        %v2166 = vmax.f32 %v2165, -1.0
        %v2167 = vadd.f32 %v2126, 1.0
        %v2168 = vadd.f32 %v2166, 1.0
        %v2169 = vmul.f32 %v2083, %v2167
        %v2170 = vmul.f32 %v2084, %v2168
        %v2171 = vpack.c.bf16 %v2170, %v2169
        %v2172 = vld [vmem:[%s593] sm:$0xf]
        %v2173 = vld [vmem:[%s593 + $0x4] sm:$0xf]
        %v2174 = vld [vmem:[%s593 + $0x8] sm:$0xf]
        %v2175 = vld [vmem:[%s593 + $0xc] sm:$0xf]
        %v2176 = vld [vmem:[%s593 + $0x10] sm:$0xf]
        %v2177 = vld [vmem:[%s593 + $0x14] sm:$0xf]
        %v2178 = vld [vmem:[%s593 + $0x18] sm:$0xf]
        %v2179 = vld [vmem:[%s593 + $0x1c] sm:$0xf]
        %v2180 = vld [vmem:[%s596] sm:$0x1]
        %v2182 = vperm.slane %v2180, 0
        %v2192 = vunpack.c.l.b16 %v2172
        %v2193 = vunpack.c.l.b16 %v2173
        %v2194 = vunpack.c.l.b16 %v2174
        %v2195 = vunpack.c.l.b16 %v2175
        %v2196 = vunpack.c.l.b16 %v2176
        %v2197 = vunpack.c.l.b16 %v2177
        %v2198 = vunpack.c.l.b16 %v2178
        %v2199 = vunpack.c.l.b16 %v2179
        %v2200 = vpack.c.b16 %v2193, %v2192
        %v2201 = vpack.c.b16 %v2195, %v2194
        %v2202 = vpack.c.b16 %v2197, %v2196
        %v2203 = vpack.c.b16 %v2199, %v2198
        %vm2208 = vcmask 523264
        %v2210 = vsel %vm2208, %v2171, 0
        %2212 = vmatpush.bf16.msra.mxu0 0
        %2213 = vmatpush.bf16.msra.mxu0 0
        %2214 = vmatpush.bf16.msra.mxu0 0
        %2215 = vmatpush.bf16.msra.mxu0 0
        %2216 = vmatpush.bf16.msra.mxu0 %v2203
        %2217 = vmatpush.bf16.msra.mxu0 %v2202
        %2218 = vmatpush.bf16.msra.mxu0 %v2201
        %2219 = vmatpush.bf16.msra.mxu0 %v2200
        %2220 = vmatmul.bf16.gmra.mxu0 %v2210
        %v2221 = vpop.f32.mrf.mxu0
        %v2222 = vadd.f32 %v2182, %v2221
        %v2223 = vpop.f32.mrf.mxu0
        %v2224 = vadd.f32 %v2182, %v2223
        %2225 = vdwg.mxu0
        %v2226 = vadd.f32 %v1987, %v2222
        %v2227 = vadd.f32 %v1988, %v2224
        %2228 = vst.msk [vmem:[#allocation2] sm:$0xff] %vm612, %v2226
        %2229 = vst.msk [vmem:[#allocation2 + $0x8] sm:$0xff] %vm612, %v2227
        // Predicated region
        $region73: #{transformer_forward.1} parent=67 // pred_check
          %p2230 = pneg %p366
        $region74: #{transformer_forward.1} parent=67 // pred_check_branch
          %2232 = sbr.rel (%p2230) target = $region76
        $region75: #{transformer_forward.1} parent=67 // pred_region
          %s2233 = smul.u32 2, %s28
          %2235 = vsyncadd [#allocation3], 0
          %s2236 = smul.addr %s2233, 8
          %s2237 = scalar_lea.hbm %s12, %s2236
          %s2238 = sshll.u32 [#allocation2], 4
          %s2239 = int_to_ptr.vmem [resolvable:$true] %s2238
          %s2240 = sshll.u32 %s2237, 4
          %s2241 = int_to_ptr.hbm [resolvable:$true] %s2240
          %2246 = dma.vmem_to_hbm [thread:$0]  %s2239, 256, %s2241, [#allocation3], 128, 128, 8
        $region76: #{transformer_forward.1} parent=67 // pred_fallthru
          _
        // Predicated region
        $region77: #{transformer_forward.1} parent=67 // pred_check
          %p2247 = pneg %p366
        $region78: #{transformer_forward.1} parent=67 // pred_check_branch
          %2249 = sbr.rel (%p2247) target = $region80
        $region79: #{transformer_forward.1} parent=67 // pred_region
          %2251 = dma.done [#allocation3], 256
        $region80: #{transformer_forward.1} parent=67 // pred_fallthru
          _
      $region68: #{transformer_forward.1} parent=5 // pred_fallthru
        _
      %p2252 = scmp.le.s32.totalorder 2, %s19
      // Predicated region
      $region81: #{transformer_forward.1} parent=5 // pred_check
        %p2253 = pneg %p2252
      $region82: #{transformer_forward.1} parent=5 // pred_check_branch
        %2255 = sbr.rel (%p2253) target = $region84
      $region83: #{transformer_forward.1} parent=5 // pred_region
        %s2256 = ssub.s32 %s19, 2
      $region84: #{transformer_forward.1} parent=5 // pred_fallthru
        _
    $region6: #{transformer_forward.1} parent=1 // loop_footer
      %s23 = sadd.s32 1, %s19
    $region7: #{transformer_forward.1} parent=1 // loop_footer_branch
      %18 = sbr.rel target = $region3
    $region8: #{transformer_forward.1} parent=1 // loop_exit
      _
    %2257 = vsyncpa [#allocation3], 1
    %s2258 = scalar_lea.sflag [#allocation3], 1
    %2259 = vsyncpa %s2258, 1

</llo_original>
